<compile_context>
chip_gen: v7x
topology: tpu7x:2x2x1
jax: 0.10.0
libtpu: 0.0.40
codegen_flags: <defaults>
</compile_context>

<pallas_src>
import functools

import jax
import jax.numpy as jnp
from jax.experimental import pallas as pl
from jax.experimental.pallas import tpu as pltpu


def _round_up(n, m):
    return ((n + m - 1) // m) * m


def ffn_kernel(x_ref, w1_ref, b1_ref, w2_ref, b2_ref, o_ref, acc_ref):
    # x_ref:  (TM, d_model)     w1_ref: (d_model, T_FF)  b1_ref: (1, T_FF)
    # w2_ref: (T_FF, d_model)   b2_ref: (1, d_model)
    # o_ref:  (TM, d_model)     acc_ref: (TM, d_model) f32 scratch
    j = pl.program_id(1)

    @pl.when(j == 0)
    def _():
        acc_ref[...] = jnp.zeros_like(acc_ref)

    # First matmul on the current d_ff chunk; bias + ReLU in f32.
    h = jnp.dot(x_ref[...], w1_ref[...], preferred_element_type=jnp.float32)
    h = jnp.maximum(h + b1_ref[...], 0.0)

    # Second matmul: cast activation to MXU operand dtype, accumulate in f32.
    acc_ref[...] += jnp.dot(h.astype(w2_ref.dtype), w2_ref[...],
                            preferred_element_type=jnp.float32)

    # Epilogue: add the output bias exactly once, cast, and write out.
    @pl.when(j == pl.num_programs(1) - 1)
    def _():
        o_ref[...] = (acc_ref[...] + b2_ref[...]).astype(o_ref.dtype)


@functools.partial(jax.jit, static_argnames=("tm", "t_ff", "matmul_dtype"))
def positionwise_feedforward(x, w1, b1, w2, b2, *, tm=256, t_ff=512,
                             matmul_dtype=None):
    """x: (B, S, d_model) -> (B, S, d_model).

    matmul_dtype: optionally cast x/W1/W2 (MXU operands) to e.g. jnp.bfloat16
    on v6e/v7x; accumulation stays f32 and output keeps x.dtype.
    """
    B, S, d_model = x.shape
    d_ff = w1.shape[1]
    out_dtype = x.dtype
    M = B * S

    # ---- tiling -----------------------------------------------------------
    # Row tile: cap at tm, keep 8-row granularity, zero-pad ragged M.
    tm_eff = min(tm, _round_up(M, 8))
    M_pad = _round_up(M, tm_eff)
    # d_ff chunk: must split d_ff evenly into 128-aligned pieces.
    t_ff_eff = min(t_ff, d_ff)
    assert d_ff % t_ff_eff == 0 and t_ff_eff % 128 == 0, "d_ff tiling invalid"
    assert d_model % 128 == 0, "d_model must be a multiple of 128"

    x2d = x.reshape(M, d_model)
    if M_pad != M:
        x2d = jnp.pad(x2d, ((0, M_pad - M), (0, 0)))

    if matmul_dtype is not None:
        x2d = x2d.astype(matmul_dtype)
        w1 = w1.astype(matmul_dtype)
        w2 = w2.astype(matmul_dtype)

    # Biases stay f32: they are added to the f32 intermediate / accumulator.
    b1 = b1.reshape(1, d_ff).astype(jnp.float32)
    b2 = b2.reshape(1, d_model).astype(jnp.float32)

    grid = (M_pad // tm_eff, d_ff // t_ff_eff)

    # ---- VMEM budget + cost hint -------------------------------------------
    itemsize = jnp.dtype(x2d.dtype).itemsize
    out_itemsize = jnp.dtype(out_dtype).itemsize
    vmem_est = (2 * tm_eff * d_model * itemsize          # x tiles (dbl-buffered)
                + 2 * d_model * t_ff_eff * itemsize      # W1 chunks
                + 2 * t_ff_eff * d_model * itemsize      # W2 chunks
                + 2 * tm_eff * d_model * out_itemsize    # out tiles
                + tm_eff * d_model * 4                   # f32 accumulator
                + 2 * (t_ff_eff + d_model) * 4)          # bias tiles
    vmem_limit = min(max(int(1.5 * vmem_est) + (4 << 20), 32 << 20), 64 << 20)

    cost = pl.CostEstimate(
        flops=4 * M_pad * d_model * d_ff,
        transcendentals=0,
        bytes_accessed=(2 * M_pad * d_model * itemsize
                        + 2 * d_model * d_ff * itemsize
                        + (d_ff + d_model) * 4),
    )

    out2d = pl.pallas_call(
        ffn_kernel,
        out_shape=jax.ShapeDtypeStruct((M_pad, d_model), out_dtype),
        grid_spec=pltpu.PrefetchScalarGridSpec(
            num_scalar_prefetch=0,
            grid=grid,
            in_specs=[
                pl.BlockSpec((tm_eff, d_model), lambda i, j: (i, 0)),    # x rows
                pl.BlockSpec((d_model, t_ff_eff), lambda i, j: (0, j)),  # W1 chunk
                pl.BlockSpec((1, t_ff_eff), lambda i, j: (0, j)),        # b1 chunk
                pl.BlockSpec((t_ff_eff, d_model), lambda i, j: (j, 0)),  # W2 chunk
                pl.BlockSpec((1, d_model), lambda i, j: (0, 0)),         # b2
            ],
            out_specs=pl.BlockSpec((tm_eff, d_model), lambda i, j: (i, 0)),
            scratch_shapes=[pltpu.VMEM((tm_eff, d_model), jnp.float32)],
        ),
        compiler_params=pltpu.CompilerParams(
            dimension_semantics=("parallel", "arbitrary"),
            vmem_limit_bytes=vmem_limit,
        ),
        cost_estimate=cost,
    )(x2d, w1, b1, w2, b2)

    if M_pad != M:
        out2d = out2d[:M]
    return out2d.reshape(B, S, d_model)


if __name__ == "__main__":
    # Spec shapes: d_model=512, d_ff=2048; small batch/seq.
    B, S = 2, 8
    d_model, d_ff = 512, 2048

    key = jax.random.PRNGKey(0)
    kx, kw1, kb1, kw2, kb2 = jax.random.split(key, 5)

    x = jax.random.normal(kx, (B, S, d_model), dtype=jnp.float32)
    # nn.Linear-style params, pre-transposed to (in, out).
    w1 = jax.random.normal(kw1, (d_model, d_ff), dtype=jnp.float32) * 0.02
    b1 = jax.random.normal(kb1, (1, d_ff), dtype=jnp.float32) * 0.02
    w2 = jax.random.normal(kw2, (d_ff, d_model), dtype=jnp.float32) * 0.02
    b2 = jax.random.normal(kb2, (1, d_model), dtype=jnp.float32) * 0.02

    out = positionwise_feedforward(x, w1, b1, w2, b2)
    out = jax.block_until_ready(out)

    # Pure-JAX reference (same math as the PyTorch module), high precision.
    x2d = x.reshape(B * S, d_model)
    h_ref = jnp.maximum(
        jnp.dot(x2d, w1, precision=jax.lax.Precision.HIGHEST) + b1[0], 0.0)
    ref = (jnp.dot(h_ref, w2, precision=jax.lax.Precision.HIGHEST)
           + b2[0]).reshape(B, S, d_model)

    assert out.shape == (B, S, d_model)
    assert jnp.allclose(out, ref, atol=1e-2, rtol=1e-2), (
        float(jnp.max(jnp.abs(out - ref))))

    # TODO(synk): the common transformer FFN adds dropout; this module has none,
    # so none is implemented.
    print("KERNEL_OK")
</pallas_src>

<mosaic_0001>
module attributes {stable_mosaic.version = 11 : i64} {
  func.func @ffn_kernel(%arg0: i32, %arg1: i32, %arg2: memref<16x512xf32, #tpu.memory_space<vmem>>, %arg3: memref<512x512xf32, #tpu.memory_space<vmem>>, %arg4: memref<1x512xf32, #tpu.memory_space<vmem>>, %arg5: memref<512x512xf32, #tpu.memory_space<vmem>>, %arg6: memref<1x512xf32, #tpu.memory_space<vmem>>, %arg7: memref<16x512xf32, #tpu.memory_space<vmem>>, %arg8: memref<16x512xf32, #tpu.memory_space<vmem>>) attributes {dimension_semantics = [#tpu.dimension_semantics<parallel>, #tpu.dimension_semantics<arbitrary>], iteration_bounds = array<i64: 1, 4>, scalar_prefetch = 0 : i64, scratch_operands = 1 : i64, tpu.core_type = #tpu.core_type<tc>, window_params = [{transform_indices = @transform_0, window_bounds = array<i64: 16, 512>}, {transform_indices = @transform_1, window_bounds = array<i64: 512, 512>}, {transform_indices = @transform_2, window_bounds = array<i64: 1, 512>}, {transform_indices = @transform_3, window_bounds = array<i64: 512, 512>}, {pipeline_mode = #tpu.pipeline_mode<synchronous>, transform_indices = @transform_4, window_bounds = array<i64: 1, 512>}, {transform_indices = @transform_5, window_bounds = array<i64: 16, 512>}]} {
    %c0_i32 = arith.constant 0 : i32
    %0 = arith.cmpi eq, %arg1, %c0_i32 : i32
    %1 = arith.extui %0 : i1 to i32
    %c0_i32_0 = arith.constant 0 : i32
    %2 = arith.cmpi ne, %1, %c0_i32_0 : i32
    scf.if %2 {
      %cst_15 = arith.constant 0.000000e+00 : f32
      %19 = vector.broadcast %cst_15 : f32 to vector<16x512xf32>
      %c0_16 = arith.constant 0 : index
      %c0_17 = arith.constant 0 : index
      %20 = vector.load %arg8[%c0_16, %c0_17] : memref<16x512xf32, #tpu.memory_space<vmem>>, vector<16x512xf32>
      tpu.vector_store %arg8[%c0_16, %c0_17], %19 {strides = array<i32>} : memref<16x512xf32, #tpu.memory_space<vmem>>, vector<16x512xf32>,
    } else {
    }
    %c0 = arith.constant 0 : index
    %c0_1 = arith.constant 0 : index
    %3 = vector.load %arg2[%c0, %c0_1] : memref<16x512xf32, #tpu.memory_space<vmem>>, vector<16x512xf32>
    %c0_2 = arith.constant 0 : index
    %c0_3 = arith.constant 0 : index
    %4 = vector.load %arg3[%c0_2, %c0_3] : memref<512x512xf32, #tpu.memory_space<vmem>>, vector<512x512xf32>
    %cst = arith.constant dense<0.000000e+00> : vector<16x512xf32>
    %5 = tpu.matmul %3, %4, %cst {dimension_numbers = #tpu.dot_dimension_numbers<[1], [0], [0], [1], [0, 0, 1, 1], [], []>} : vector<16x512xf32>, vector<512x512xf32>, vector<16x512xf32> -> vector<16x512xf32>
    %c0_4 = arith.constant 0 : index
    %c0_5 = arith.constant 0 : index
    %6 = vector.load %arg4[%c0_4, %c0_5] : memref<1x512xf32, #tpu.memory_space<vmem>>, vector<1x512xf32>
    %7 = vector.broadcast %6 : vector<1x512xf32> to vector<16x512xf32>
    %8 = arith.addf %5, %7 : vector<16x512xf32>
    %cst_6 = arith.constant 0.000000e+00 : f32
    %9 = vector.broadcast %cst_6 : f32 to vector<16x512xf32>
    %10 = arith.maximumf %8, %9 : vector<16x512xf32>
    %c0_7 = arith.constant 0 : index
    %c0_8 = arith.constant 0 : index
    %11 = vector.load %arg8[%c0_7, %c0_8] : memref<16x512xf32, #tpu.memory_space<vmem>>, vector<16x512xf32>
    %c0_9 = arith.constant 0 : index
    %c0_10 = arith.constant 0 : index
    %12 = vector.load %arg5[%c0_9, %c0_10] : memref<512x512xf32, #tpu.memory_space<vmem>>, vector<512x512xf32>
    %cst_11 = arith.constant dense<0.000000e+00> : vector<16x512xf32>
    %13 = tpu.matmul %10, %12, %cst_11 {dimension_numbers = #tpu.dot_dimension_numbers<[1], [0], [0], [1], [0, 0, 1, 1], [], []>} : vector<16x512xf32>, vector<512x512xf32>, vector<16x512xf32> -> vector<16x512xf32>
    %14 = arith.addf %11, %13 : vector<16x512xf32>
    %c0_12 = arith.constant 0 : index
    %c0_13 = arith.constant 0 : index
    %15 = vector.load %arg8[%c0_12, %c0_13] : memref<16x512xf32, #tpu.memory_space<vmem>>, vector<16x512xf32>
    tpu.vector_store %arg8[%c0_12, %c0_13], %14 {strides = array<i32>} : memref<16x512xf32, #tpu.memory_space<vmem>>, vector<16x512xf32>,
    %c3_i32 = arith.constant 3 : i32
    %16 = arith.cmpi eq, %arg1, %c3_i32 : i32
    %17 = arith.extui %16 : i1 to i32
    %c0_i32_14 = arith.constant 0 : i32
    %18 = arith.cmpi ne, %17, %c0_i32_14 : i32
    scf.if %18 {
      %c0_15 = arith.constant 0 : index
      %c0_16 = arith.constant 0 : index
      %19 = vector.load %arg8[%c0_15, %c0_16] : memref<16x512xf32, #tpu.memory_space<vmem>>, vector<16x512xf32>
      %c0_17 = arith.constant 0 : index
      %c0_18 = arith.constant 0 : index
      %20 = vector.load %arg6[%c0_17, %c0_18] : memref<1x512xf32, #tpu.memory_space<vmem>>, vector<1x512xf32>
      %21 = vector.broadcast %20 : vector<1x512xf32> to vector<16x512xf32>
      %22 = arith.addf %19, %21 : vector<16x512xf32>
      %c0_19 = arith.constant 0 : index
      %c0_20 = arith.constant 0 : index
      %23 = vector.load %arg7[%c0_19, %c0_20] : memref<16x512xf32, #tpu.memory_space<vmem>>, vector<16x512xf32>
      tpu.vector_store %arg7[%c0_19, %c0_20], %22 {strides = array<i32>} : memref<16x512xf32, #tpu.memory_space<vmem>>, vector<16x512xf32>,
    } else {
    }
    return
  }
  func.func @transform_0(%arg0: i32, %arg1: i32) -> (i32, i32) {
    %c0_i32 = arith.constant 0 : i32
    %c0_i32_0 = arith.constant 0 : i32
    return %arg0, %c0_i32 : i32, i32
  }
  func.func @transform_1(%arg0: i32, %arg1: i32) -> (i32, i32) {
    %c0_i32 = arith.constant 0 : i32
    %c0_i32_0 = arith.constant 0 : i32
    return %c0_i32, %arg1 : i32, i32
  }
  func.func @transform_2(%arg0: i32, %arg1: i32) -> (i32, i32) {
    %c0_i32 = arith.constant 0 : i32
    %c0_i32_0 = arith.constant 0 : i32
    return %c0_i32, %arg1 : i32, i32
  }
  func.func @transform_3(%arg0: i32, %arg1: i32) -> (i32, i32) {
    %c0_i32 = arith.constant 0 : i32
    %c0_i32_0 = arith.constant 0 : i32
    return %arg1, %c0_i32 : i32, i32
  }
  func.func @transform_4(%arg0: i32, %arg1: i32) -> (i32, i32) {
    %c0_i32 = arith.constant 0 : i32
    %c0_i32_0 = arith.constant 0 : i32
    %c0_i32_1 = arith.constant 0 : i32
    return %c0_i32, %c0_i32_0 : i32, i32
  }
  func.func @transform_5(%arg0: i32, %arg1: i32) -> (i32, i32) {
    %c0_i32 = arith.constant 0 : i32
    %c0_i32_0 = arith.constant 0 : i32
    return %arg0, %c0_i32 : i32, i32
  }
}

</mosaic_0001>

<llo_original>
// kernel: positionwise_feedforward.1
$region0: #{positionwise_feedforward.1}
  #allocation0 [shape = 'u32[]', space=smem, size = 0x4, offset = 0x4, fixed_abs, tag = 'smem constant byte address 0x4 - core index']
  #allocation1 [shape = 'u32[144,128]{1,0:T(1,128)}', space=vmem, size = 0x12000, scoped, tag = 'internal scratch']
  #allocation2 [shape = 'f32[16,512]{1,0:T(8,128)}', space=vmem, size = 0x8000, scoped, tag = 'scratch operand']
  %s0 = inlined_call_operand.hbm [shape: f32[16,512], index: 0, kind: input, shape index: {}]
  %s1 = inlined_call_operand.hbm [shape: f32[512,2048], index: 1, kind: input, shape index: {}]
  %s2 = inlined_call_operand.hbm [shape: f32[1,2048], index: 2, kind: input, shape index: {}]
  %s3 = inlined_call_operand.hbm [shape: f32[2048,512], index: 3, kind: input, shape index: {}]
  %s4 = inlined_call_operand.hbm [shape: f32[1,512], index: 4, kind: input, shape index: {}]
  %s5 = inlined_call_operand.hbm [shape: f32[16,512], index: 5, kind: output, shape index: {}]
  %s6 = sld [smem:[#allocation0]]
  $region81: #{positionwise_feedforward.1} parent=0
    _
  %s8 = ssub.s32 1, %s6
  %s9 = scalar_select 0, %s8, %s6
  $region1: #{positionwise_feedforward.1} parent=0
    #allocation3 [shape = 'u8[32768]{0}', space=vmem, size = 0x8000, scoped, tag = 'input window, operand 0, single buffered']
    #allocation4 [shape = 's32[2]{0}', space=sflag, size = 0x8, scoped, tag = 'scoped memory for positionwise_feedforward.1']
    #allocation5 [shape = 's32[2]{0}', space=sflag, size = 0x8, scoped, tag = 'scoped memory for positionwise_feedforward.1']
    #allocation6 [shape = 'u8[2097152]{0}', space=vmem, size = 0x200000, scoped, tag = 'input window, operand 1']
    #allocation7 [shape = 's32[2]{0}', space=sflag, size = 0x8, scoped, tag = 'scoped memory for positionwise_feedforward.1']
    #allocation8 [shape = 'u8[4096]{0}', space=vmem, size = 0x1000, scoped, tag = 'input window, operand 2']
    #allocation9 [shape = 'u8[2097152]{0}', space=vmem, size = 0x200000, scoped, tag = 'input window, operand 3']
    #allocation10 [shape = 's32[2]{0}', space=sflag, size = 0x8, scoped, tag = 'scoped memory for positionwise_feedforward.1']
    #allocation11 [shape = 'u8[2048]{0}', space=vmem, size = 0x800, scoped, tag = 'input window, operand 4, single buffered']
    #allocation12 [shape = 'u8[32768]{0}', space=vmem, size = 0x8000, scoped, tag = 'output window, operand 0, single buffered']
    %10 = vsyncpa [#allocation4], 0
    %11 = vsyncpa [#allocation7], 0
    %s12 = scalar_lea.sflag [#allocation7], 1
    %13 = vsyncpa %s12, 0
    %14 = vsyncpa [#allocation10], 0
    %s15 = scalar_lea.sflag [#allocation10], 1
    %16 = vsyncpa %s15, 0
    %17 = vsyncpa [#allocation5], 0
    loop: start=0, step=1, limit=6
    $region2: #{positionwise_feedforward.1} parent=1 // loop_pre_header
      _
    $region3: #{positionwise_feedforward.1} parent=1 // loop_header
      %s19 = sphi 0, %s23
      %p20 = scmp.ge.s32.totalorder %s19, 6
      %s26 = sphi 0, %s38
      %s27 = sphi 0, %s34
      %s28 = sphi 0, %s26
      %s29 = sphi 0, %s27
      %s30 = sphi 0, %s28
      %s31 = sphi 0, %s29
      %s41 = sphi 0, %s43
      %s44 = sphi 0, %s41
      %s45 = sphi 0, %s44
      %s61 = sphi 0, %s45
      %s67 = sphi 0, %s69
      %s70 = sphi 0, %s67
      %s71 = sphi 0, %s70
      %s87 = sphi 0, %s71
      %s93 = sphi 0, %s95
      %s96 = sphi 0, %s93
      %s97 = sphi 0, %s96
      %s113 = sphi 0, %s97
      %s119 = sphi 0, %s121
      %s122 = sphi 0, %s119
      %s123 = sphi 0, %s122
      %s139 = sphi 0, %s123
      %s143 = sphi 0, %s143
      %s145 = sphi 0, %s143
      %s146 = sphi 0, %s145
      %s160 = sphi 0, %s146
      %s166 = sphi 0, %s168
      %s169 = sphi 0, %s166
      %s170 = sphi 0, %s169
      %s186 = sphi 0, %s170
    $region4: #{positionwise_feedforward.1} parent=1 // loop_header_branch
      %22 = sbr.rel (%p20) target = $region8
    $region5: #{positionwise_feedforward.1} parent=1 // loop_body
      %s24 = ssub.s32 %s19, 1
      %s25 = ssub.s32 %s19, 2
      %s32 = sadd.s32 1, %s27
      %p33 = scmp.ge.s32.totalorder %s32, 4
      %s34 = scalar_select %p33, 0, %s32
      %s35 = sadd.s32 1, %s26
      %s36 = scalar_select %p33, %s35, %s26
      %p37 = scmp.ge.s32.totalorder %s36, 1
      %s38 = scalar_select %p37, 0, %s36
      %s39 = ssub.s32 %s26, %s38
      %p40 = scmp.eq.s32.totalorder %s39, 0
      %s42 = sadd.s32 %s41, 1
      %s43 = scalar_select %p40, %s41, %s42
      %p46 = pneg %p40
      %p47 = scmp.eq.s32.totalorder %s19, 3
      %p48 = por %p46, %p47
      %p49 = scmp.ne.s32.totalorder %s41, %s44
      %p50 = scmp.eq.s32.totalorder %s19, 0
      %p51 = por %p49, %p50
      %p52 = scmp.ne.s32.totalorder %s41, %s44
      %p53 = scmp.eq.s32.totalorder %s24, 3
      %p54 = por %p52, %p53
      %p55 = scmp.ne.s32.totalorder %s44, %s45
      %p56 = scmp.eq.s32.totalorder %s24, 0
      %p57 = por %p55, %p56
      %p58 = scmp.ne.s32.totalorder %s44, %s45
      %p59 = scmp.eq.s32.totalorder %s25, 3
      %p60 = por %p58, %p59
      %p62 = scmp.ne.s32.totalorder %s45, %s61
      %p63 = scmp.eq.s32.totalorder %s25, 0
      %p64 = por %p62, %p63
      %s65 = ssub.s32 %s27, %s34
      %p66 = scmp.eq.s32.totalorder %s65, 0
      %s68 = sadd.s32 %s67, 1
      %s69 = scalar_select %p66, %s67, %s68
      %p72 = pneg %p66
      %p73 = scmp.eq.s32.totalorder %s19, 3
      %p74 = por %p72, %p73
      %p75 = scmp.ne.s32.totalorder %s67, %s70
      %p76 = scmp.eq.s32.totalorder %s19, 0
      %p77 = por %p75, %p76
      %p78 = scmp.ne.s32.totalorder %s67, %s70
      %p79 = scmp.eq.s32.totalorder %s24, 3
      %p80 = por %p78, %p79
      %p81 = scmp.ne.s32.totalorder %s70, %s71
      %p82 = scmp.eq.s32.totalorder %s24, 0
      %p83 = por %p81, %p82
      %p84 = scmp.ne.s32.totalorder %s70, %s71
      %p85 = scmp.eq.s32.totalorder %s25, 3
      %p86 = por %p84, %p85
      %p88 = scmp.ne.s32.totalorder %s71, %s87
      %p89 = scmp.eq.s32.totalorder %s25, 0
      %p90 = por %p88, %p89
      %s91 = ssub.s32 %s27, %s34
      %p92 = scmp.eq.s32.totalorder %s91, 0
      %s94 = sadd.s32 %s93, 1
      %s95 = scalar_select %p92, %s93, %s94
      %p98 = pneg %p92
      %p99 = scmp.eq.s32.totalorder %s19, 3
      %p100 = por %p98, %p99
      %p101 = scmp.ne.s32.totalorder %s93, %s96
      %p102 = scmp.eq.s32.totalorder %s19, 0
      %p103 = por %p101, %p102
      %p104 = scmp.ne.s32.totalorder %s93, %s96
      %p105 = scmp.eq.s32.totalorder %s24, 3
      %p106 = por %p104, %p105
      %p107 = scmp.ne.s32.totalorder %s96, %s97
      %p108 = scmp.eq.s32.totalorder %s24, 0
      %p109 = por %p107, %p108
      %p110 = scmp.ne.s32.totalorder %s96, %s97
      %p111 = scmp.eq.s32.totalorder %s25, 3
      %p112 = por %p110, %p111
      %p114 = scmp.ne.s32.totalorder %s97, %s113
      %p115 = scmp.eq.s32.totalorder %s25, 0
      %p116 = por %p114, %p115
      %s117 = ssub.s32 %s27, %s34
      %p118 = scmp.eq.s32.totalorder %s117, 0
      %s120 = sadd.s32 %s119, 1
      %s121 = scalar_select %p118, %s119, %s120
      %p124 = pneg %p118
      %p125 = scmp.eq.s32.totalorder %s19, 3
      %p126 = por %p124, %p125
      %p127 = scmp.ne.s32.totalorder %s119, %s122
      %p128 = scmp.eq.s32.totalorder %s19, 0
      %p129 = por %p127, %p128
      %p130 = scmp.ne.s32.totalorder %s119, %s122
      %p131 = scmp.eq.s32.totalorder %s24, 3
      %p132 = por %p130, %p131
      %p133 = scmp.ne.s32.totalorder %s122, %s123
      %p134 = scmp.eq.s32.totalorder %s24, 0
      %p135 = por %p133, %p134
      %p136 = scmp.ne.s32.totalorder %s122, %s123
      %p137 = scmp.eq.s32.totalorder %s25, 3
      %p138 = por %p136, %p137
      %p140 = scmp.ne.s32.totalorder %s123, %s139
      %p141 = scmp.eq.s32.totalorder %s25, 0
      %p142 = por %p140, %p141
      %s144 = sadd.s32 %s143, 1
      %p147 = scmp.eq.s32.totalorder %s19, 3
      %p148 = scmp.ne.s32.totalorder %s143, %s145
      %p149 = scmp.eq.s32.totalorder %s19, 0
      %p150 = por %p148, %p149
      %p151 = scmp.ne.s32.totalorder %s143, %s145
      %p152 = scmp.eq.s32.totalorder %s24, 3
      %p153 = por %p151, %p152
      %p154 = scmp.ne.s32.totalorder %s145, %s146
      %p155 = scmp.eq.s32.totalorder %s24, 0
      %p156 = por %p154, %p155
      %p157 = scmp.ne.s32.totalorder %s145, %s146
      %p158 = scmp.eq.s32.totalorder %s25, 3
      %p159 = por %p157, %p158
      %p161 = scmp.ne.s32.totalorder %s146, %s160
      %p162 = scmp.eq.s32.totalorder %s25, 0
      %p163 = por %p161, %p162
      %s164 = ssub.s32 %s26, %s38
      %p165 = scmp.eq.s32.totalorder %s164, 0
      %s167 = sadd.s32 %s166, 1
      %s168 = scalar_select %p165, %s166, %s167
      %p171 = pneg %p165
      %p172 = scmp.eq.s32.totalorder %s19, 3
      %p173 = por %p171, %p172
      %p174 = scmp.ne.s32.totalorder %s166, %s169
      %p175 = scmp.eq.s32.totalorder %s19, 0
      %p176 = por %p174, %p175
      %p177 = scmp.ne.s32.totalorder %s166, %s169
      %p178 = scmp.eq.s32.totalorder %s24, 3
      %p179 = por %p177, %p178
      %p180 = scmp.ne.s32.totalorder %s169, %s170
      %p181 = scmp.eq.s32.totalorder %s24, 0
      %p182 = por %p180, %p181
      %p183 = scmp.ne.s32.totalorder %s169, %s170
      %p184 = scmp.eq.s32.totalorder %s25, 3
      %p185 = por %p183, %p184
      %p187 = scmp.ne.s32.totalorder %s170, %s186
      %p188 = scmp.eq.s32.totalorder %s25, 0
      %p189 = por %p187, %p188
      %p190 = scmp.le.s32.totalorder 1, %s19
      %p191 = scmp.lt.s32.totalorder %s19, 5
      %p192 = pnand %p190, %p191
      %p193 = pneg %p192
      // Predicated region
      $region9: #{positionwise_feedforward.1} parent=5 // pred_check
        _
      $region10: #{positionwise_feedforward.1} parent=5 // pred_check_branch
        %195 = sbr.rel (%p192) target = $region12
      $region11: #{positionwise_feedforward.1} parent=5 // pred_region
        %s196 = ssub.s32 %s19, 1
        // Predicated region
        $region13: #{positionwise_feedforward.1} parent=11 // pred_check
          %p197 = pneg %p57
        $region14: #{positionwise_feedforward.1} parent=11 // pred_check_branch
          %199 = sbr.rel (%p197) target = $region16
        $region15: #{positionwise_feedforward.1} parent=11 // pred_region
          %s200 = smul.u32 2, %s28
          %s202 = ssub.s32 1024, 1024
          %203 = vsyncadd [#allocation4], %s202
          %s204 = smul.addr %s200, 4
          %s205 = smul.addr %s204, 128
          %s206 = scalar_lea.hbm %s0, %s205
          %s207 = sshll.u32 [#allocation3], 4
          %s208 = int_to_ptr.vmem [resolvable:$true] %s207
          %213 = dma.hbm_to_vmem [thread:$0]  %s206, 1024, %s208, [#allocation4], 512, 512, 32
        $region16: #{positionwise_feedforward.1} parent=11 // pred_fallthru
          _
        // Predicated region
        $region17: #{positionwise_feedforward.1} parent=11 // pred_check
          %p214 = pneg %p156
        $region18: #{positionwise_feedforward.1} parent=11 // pred_check_branch
          %216 = sbr.rel (%p214) target = $region20
        $region19: #{positionwise_feedforward.1} parent=11 // pred_region
          %s218 = ssub.s32 64, 64
          %219 = vsyncadd [#allocation10], %s218
          %s221 = sshll.u32 [#allocation11], 4
          %s222 = int_to_ptr.vmem [resolvable:$true] %s221
          %224 = dma.hbm_to_vmem [thread:$0]  %s4, 64, %s222, [#allocation10]
        $region20: #{positionwise_feedforward.1} parent=11 // pred_fallthru
          _
      $region12: #{positionwise_feedforward.1} parent=5 // pred_fallthru
        _
      %p225 = scmp.lt.s32.totalorder %s19, 4
      // Predicated region
      $region21: #{positionwise_feedforward.1} parent=5 // pred_check
        %p226 = pneg %p225
      $region22: #{positionwise_feedforward.1} parent=5 // pred_check_branch
        %228 = sbr.rel (%p226) target = $region24
      $region23: #{positionwise_feedforward.1} parent=5 // pred_region
        // Predicated region
        $region25: #{positionwise_feedforward.1} parent=23 // pred_check
          %p229 = pneg %p77
        $region26: #{positionwise_feedforward.1} parent=23 // pred_check_branch
          %231 = sbr.rel (%p229) target = $region28
        $region27: #{positionwise_feedforward.1} parent=23 // pred_region
          %s232 = sand.u32 %s19, 1
          %s233 = scalar_lea.sflag [#allocation7], %s232
          %s234 = sand.u32 %s67, 1
          %s235 = smul.addr %s234, 2048
          %s236 = scalar_lea.vmem [#allocation6], %s235
          %s237 = smul.u32 4, %s27
          %s239 = ssub.s32 32768, 32768
          %240 = vsyncadd %s233, %s239
          %s241 = smul.addr %s237, 128
          %s242 = scalar_lea.hbm %s1, %s241
          %s243 = sshll.u32 %s236, 4
          %s244 = int_to_ptr.vmem [resolvable:$true] %s243
          %249 = dma.hbm_to_vmem [thread:$0]  %s242, 32768, %s244, %s233, 2048, 512, 32
        $region28: #{positionwise_feedforward.1} parent=23 // pred_fallthru
          _
        // Predicated region
        $region29: #{positionwise_feedforward.1} parent=23 // pred_check
          %p250 = pneg %p103
        $region30: #{positionwise_feedforward.1} parent=23 // pred_check_branch
          %252 = sbr.rel (%p250) target = $region32
        $region31: #{positionwise_feedforward.1} parent=23 // pred_region
          %s253 = sand.u32 %s19, 1
          %s254 = scalar_lea.sflag [#allocation7], %s253
          %s255 = sand.u32 %s93, 1
          %s256 = smul.addr %s255, 4
          %s257 = scalar_lea.vmem [#allocation8], %s256
          %s258 = smul.u32 4, %s27
          %s260 = ssub.s32 64, 64
          %261 = vsyncadd %s254, %s260
          %s262 = smul.addr %s258, 16
          %s263 = scalar_lea.hbm %s2, %s262
          %s265 = sshll.u32 %s257, 4
          %s266 = int_to_ptr.vmem [resolvable:$true] %s265
          %268 = dma.hbm_to_vmem [thread:$0]  %s263, 64, %s266, %s254
        $region32: #{positionwise_feedforward.1} parent=23 // pred_fallthru
          _
        // Predicated region
        $region33: #{positionwise_feedforward.1} parent=23 // pred_check
          %p269 = pneg %p129
        $region34: #{positionwise_feedforward.1} parent=23 // pred_check_branch
          %271 = sbr.rel (%p269) target = $region36
        $region35: #{positionwise_feedforward.1} parent=23 // pred_region
          %s272 = sand.u32 %s19, 1
          %s273 = scalar_lea.sflag [#allocation10], %s272
          %s274 = sand.u32 %s119, 1
          %s275 = smul.addr %s274, 2048
          %s276 = scalar_lea.vmem [#allocation9], %s275
          %s277 = smul.u32 64, %s27
          %s279 = ssub.s32 32768, 32768
          %280 = vsyncadd %s273, %s279
          %s281 = smul.addr %s277, 4
          %s282 = smul.addr %s281, 128
          %s283 = scalar_lea.hbm %s3, %s282
          %s284 = sshll.u32 %s276, 4
          %s285 = int_to_ptr.vmem [resolvable:$true] %s284
          %290 = dma.hbm_to_vmem [thread:$0]  %s283, 32768, %s285, %s273, 512, 512, 32
        $region36: #{positionwise_feedforward.1} parent=23 // pred_fallthru
          _
      $region24: #{positionwise_feedforward.1} parent=5 // pred_fallthru
        _
      %p291 = scmp.le.s32.totalorder 1, %s19
      %p292 = scmp.lt.s32.totalorder %s19, 5
      %p293 = pnand %p291, %p292
      %p294 = pneg %p293
      // Predicated region
      $region37: #{positionwise_feedforward.1} parent=5 // pred_check
        _
      $region38: #{positionwise_feedforward.1} parent=5 // pred_check_branch
        %296 = sbr.rel (%p293) target = $region40
      $region39: #{positionwise_feedforward.1} parent=5 // pred_region
        %s297 = ssub.s32 %s19, 1
        // Predicated region
        $region41: #{positionwise_feedforward.1} parent=39 // pred_check
          %p298 = pneg %p57
        $region42: #{positionwise_feedforward.1} parent=39 // pred_check_branch
          %300 = sbr.rel (%p298) target = $region44
        $region43: #{positionwise_feedforward.1} parent=39 // pred_region
          %301 = dma.done [#allocation4], 1024
        $region44: #{positionwise_feedforward.1} parent=39 // pred_fallthru
          _
        %s302 = sand.u32 %s24, 1
        %s303 = scalar_lea.sflag [#allocation7], %s302
        %s304 = sand.u32 %s70, 1
        %s305 = smul.addr %s304, 2048
        %s306 = scalar_lea.vmem [#allocation6], %s305
        // Predicated region
        $region45: #{positionwise_feedforward.1} parent=39 // pred_check
          %p307 = pneg %p83
        $region46: #{positionwise_feedforward.1} parent=39 // pred_check_branch
          %309 = sbr.rel (%p307) target = $region48
        $region47: #{positionwise_feedforward.1} parent=39 // pred_region
          %310 = dma.done %s303, 32768
        $region48: #{positionwise_feedforward.1} parent=39 // pred_fallthru
          _
        %s311 = sand.u32 %s24, 1
        %s312 = scalar_lea.sflag [#allocation7], %s311
        %s313 = sand.u32 %s96, 1
        %s314 = smul.addr %s313, 4
        %s315 = scalar_lea.vmem [#allocation8], %s314
        // Predicated region
        $region49: #{positionwise_feedforward.1} parent=39 // pred_check
          %p316 = pneg %p109
        $region50: #{positionwise_feedforward.1} parent=39 // pred_check_branch
          %318 = sbr.rel (%p316) target = $region52
        $region51: #{positionwise_feedforward.1} parent=39 // pred_region
          %319 = dma.done %s312, 64
        $region52: #{positionwise_feedforward.1} parent=39 // pred_fallthru
          _
        %s320 = sand.u32 %s24, 1
        %s321 = scalar_lea.sflag [#allocation10], %s320
        %s322 = sand.u32 %s122, 1
        %s323 = smul.addr %s322, 2048
        %s324 = scalar_lea.vmem [#allocation9], %s323
        // Predicated region
        $region53: #{positionwise_feedforward.1} parent=39 // pred_check
          %p325 = pneg %p135
        $region54: #{positionwise_feedforward.1} parent=39 // pred_check_branch
          %327 = sbr.rel (%p325) target = $region56
        $region55: #{positionwise_feedforward.1} parent=39 // pred_region
          %328 = dma.done %s321, 32768
        $region56: #{positionwise_feedforward.1} parent=39 // pred_fallthru
          _
        // Predicated region
        $region57: #{positionwise_feedforward.1} parent=39 // pred_check
          %p329 = pneg %p156
        $region58: #{positionwise_feedforward.1} parent=39 // pred_check_branch
          %331 = sbr.rel (%p329) target = $region60
        $region59: #{positionwise_feedforward.1} parent=39 // pred_region
          %332 = dma.done [#allocation10], 64
        $region60: #{positionwise_feedforward.1} parent=39 // pred_fallthru
          _
        %p333 = pneg %p57
        %p334 = pneg %p54
        %s335 = sand.u32 %s24, 1
        %s336 = scalar_lea.sflag [#allocation7], %s335
        %s337 = sand.u32 %s70, 1
        %s338 = smul.addr %s337, 2048
        %s339 = scalar_lea.vmem [#allocation6], %s338
        %p340 = pneg %p83
        %p341 = pneg %p80
        %s342 = sand.u32 %s24, 1
        %s343 = scalar_lea.sflag [#allocation7], %s342
        %s344 = sand.u32 %s96, 1
        %s345 = smul.addr %s344, 4
        %s346 = scalar_lea.vmem [#allocation8], %s345
        %p347 = pneg %p109
        %p348 = pneg %p106
        %s349 = sand.u32 %s24, 1
        %s350 = scalar_lea.sflag [#allocation10], %s349
        %s351 = sand.u32 %s122, 1
        %s352 = smul.addr %s351, 2048
        %s353 = scalar_lea.vmem [#allocation9], %s352
        %p354 = pneg %p135
        %p355 = pneg %p132
        %p356 = pneg %p156
        %p357 = pneg %p153
        %p358 = pneg %p182
        %p359 = pneg %p179
        %s360 = smul.u32 2, %s28
        %s361 = smul.u32 4, %s29
        %s362 = smul.u32 4, %s29
        %s363 = smul.u32 64, %s29
        %s364 = smul.u32 2, %s28
        %p365 = scmp.eq.s32.totalorder %s29, 0
        // Predicated region
        $region61: #{positionwise_feedforward.1} parent=39 // pred_check
          %p366 = pneg %p365
        $region62: #{positionwise_feedforward.1} parent=39 // pred_check_branch
          %368 = sbr.rel (%p366) target = $region64
        $region63: #{positionwise_feedforward.1} parent=39 // pred_region
          %369 = vst [vmem:[#allocation2] sm:$0xff] 0.0
          %370 = vst [vmem:[#allocation2 + $0x8] sm:$0xff] 0.0
          %371 = vst [vmem:[#allocation2 + $0x10] sm:$0xff] 0.0
          %372 = vst [vmem:[#allocation2 + $0x18] sm:$0xff] 0.0
          %373 = vst [vmem:[#allocation2 + $0x20] sm:$0xff] 0.0
          %374 = vst [vmem:[#allocation2 + $0x28] sm:$0xff] 0.0
          %375 = vst [vmem:[#allocation2 + $0x30] sm:$0xff] 0.0
          %376 = vst [vmem:[#allocation2 + $0x38] sm:$0xff] 0.0
        $region64: #{positionwise_feedforward.1} parent=39 // pred_fallthru
          _
        %v377 = vld [vmem:[#allocation3] sm:$0xff]
        %v378 = vld [vmem:[#allocation3 + $0x8] sm:$0xff]
        %v379 = vld [vmem:[#allocation3 + $0x10] sm:$0xff]
        %v380 = vld [vmem:[#allocation3 + $0x18] sm:$0xff]
        %v381 = vld [vmem:[#allocation3 + $0x20] sm:$0xff]
        %v382 = vld [vmem:[#allocation3 + $0x28] sm:$0xff]
        %v383 = vld [vmem:[#allocation3 + $0x30] sm:$0xff]
        %v384 = vld [vmem:[#allocation3 + $0x38] sm:$0xff]
        %v385 = vld [vmem:[%s306] sm:$0xff]
        %v386 = vld [vmem:[%s306 + $0x8] sm:$0xff]
        %v387 = vld [vmem:[%s306 + $0x10] sm:$0xff]
        %v388 = vld [vmem:[%s306 + $0x18] sm:$0xff]
        %v389 = vld [vmem:[%s306 + $0x20] sm:$0xff]
        %v390 = vld [vmem:[%s306 + $0x28] sm:$0xff]
        %v391 = vld [vmem:[%s306 + $0x30] sm:$0xff]
        %v392 = vld [vmem:[%s306 + $0x38] sm:$0xff]
        %v393 = vld [vmem:[%s306 + $0x40] sm:$0xff]
        %v394 = vld [vmem:[%s306 + $0x48] sm:$0xff]
        %v395 = vld [vmem:[%s306 + $0x50] sm:$0xff]
        %v396 = vld [vmem:[%s306 + $0x58] sm:$0xff]
        %v397 = vld [vmem:[%s306 + $0x60] sm:$0xff]
        %v398 = vld [vmem:[%s306 + $0x68] sm:$0xff]
        %v399 = vld [vmem:[%s306 + $0x70] sm:$0xff]
        %v400 = vld [vmem:[%s306 + $0x78] sm:$0xff]
        %v401 = vld [vmem:[%s306 + $0x80] sm:$0xff]
        %v402 = vld [vmem:[%s306 + $0x88] sm:$0xff]
        %v403 = vld [vmem:[%s306 + $0x90] sm:$0xff]
        %v404 = vld [vmem:[%s306 + $0x98] sm:$0xff]
        %v405 = vld [vmem:[%s306 + $0xa0] sm:$0xff]
        %v406 = vld [vmem:[%s306 + $0xa8] sm:$0xff]
        %v407 = vld [vmem:[%s306 + $0xb0] sm:$0xff]
        %v408 = vld [vmem:[%s306 + $0xb8] sm:$0xff]
        %v409 = vld [vmem:[%s306 + $0xc0] sm:$0xff]
        %v410 = vld [vmem:[%s306 + $0xc8] sm:$0xff]
        %v411 = vld [vmem:[%s306 + $0xd0] sm:$0xff]
        %v412 = vld [vmem:[%s306 + $0xd8] sm:$0xff]
        %v413 = vld [vmem:[%s306 + $0xe0] sm:$0xff]
        %v414 = vld [vmem:[%s306 + $0xe8] sm:$0xff]
        %v415 = vld [vmem:[%s306 + $0xf0] sm:$0xff]
        %v416 = vld [vmem:[%s306 + $0xf8] sm:$0xff]
        %v417 = vld [vmem:[%s306 + $0x100] sm:$0xff]
        %v418 = vld [vmem:[%s306 + $0x108] sm:$0xff]
        %v419 = vld [vmem:[%s306 + $0x110] sm:$0xff]
        %v420 = vld [vmem:[%s306 + $0x118] sm:$0xff]
        %v421 = vld [vmem:[%s306 + $0x120] sm:$0xff]
        %v422 = vld [vmem:[%s306 + $0x128] sm:$0xff]
        %v423 = vld [vmem:[%s306 + $0x130] sm:$0xff]
        %v424 = vld [vmem:[%s306 + $0x138] sm:$0xff]
        %v425 = vld [vmem:[%s306 + $0x140] sm:$0xff]
        %v426 = vld [vmem:[%s306 + $0x148] sm:$0xff]
        %v427 = vld [vmem:[%s306 + $0x150] sm:$0xff]
        %v428 = vld [vmem:[%s306 + $0x158] sm:$0xff]
        %v429 = vld [vmem:[%s306 + $0x160] sm:$0xff]
        %v430 = vld [vmem:[%s306 + $0x168] sm:$0xff]
        %v431 = vld [vmem:[%s306 + $0x170] sm:$0xff]
        %v432 = vld [vmem:[%s306 + $0x178] sm:$0xff]
        %v433 = vld [vmem:[%s306 + $0x180] sm:$0xff]
        %v434 = vld [vmem:[%s306 + $0x188] sm:$0xff]
        %v435 = vld [vmem:[%s306 + $0x190] sm:$0xff]
        %v436 = vld [vmem:[%s306 + $0x198] sm:$0xff]
        %v437 = vld [vmem:[%s306 + $0x1a0] sm:$0xff]
        %v438 = vld [vmem:[%s306 + $0x1a8] sm:$0xff]
        %v439 = vld [vmem:[%s306 + $0x1b0] sm:$0xff]
        %v440 = vld [vmem:[%s306 + $0x1b8] sm:$0xff]
        %v441 = vld [vmem:[%s306 + $0x1c0] sm:$0xff]
        %v442 = vld [vmem:[%s306 + $0x1c8] sm:$0xff]
        %v443 = vld [vmem:[%s306 + $0x1d0] sm:$0xff]
        %v444 = vld [vmem:[%s306 + $0x1d8] sm:$0xff]
        %v445 = vld [vmem:[%s306 + $0x1e0] sm:$0xff]
        %v446 = vld [vmem:[%s306 + $0x1e8] sm:$0xff]
        %v447 = vld [vmem:[%s306 + $0x1f0] sm:$0xff]
        %v448 = vld [vmem:[%s306 + $0x1f8] sm:$0xff]
        %v449 = vld [vmem:[%s306 + $0x200] sm:$0xff]
        %v450 = vld [vmem:[%s306 + $0x208] sm:$0xff]
        %v451 = vld [vmem:[%s306 + $0x210] sm:$0xff]
        %v452 = vld [vmem:[%s306 + $0x218] sm:$0xff]
        %v453 = vld [vmem:[%s306 + $0x220] sm:$0xff]
        %v454 = vld [vmem:[%s306 + $0x228] sm:$0xff]
        %v455 = vld [vmem:[%s306 + $0x230] sm:$0xff]
        %v456 = vld [vmem:[%s306 + $0x238] sm:$0xff]
        %v457 = vld [vmem:[%s306 + $0x240] sm:$0xff]
        %v458 = vld [vmem:[%s306 + $0x248] sm:$0xff]
        %v459 = vld [vmem:[%s306 + $0x250] sm:$0xff]
        %v460 = vld [vmem:[%s306 + $0x258] sm:$0xff]
        %v461 = vld [vmem:[%s306 + $0x260] sm:$0xff]
        %v462 = vld [vmem:[%s306 + $0x268] sm:$0xff]
        %v463 = vld [vmem:[%s306 + $0x270] sm:$0xff]
        %v464 = vld [vmem:[%s306 + $0x278] sm:$0xff]
        %v465 = vld [vmem:[%s306 + $0x280] sm:$0xff]
        %v466 = vld [vmem:[%s306 + $0x288] sm:$0xff]
        %v467 = vld [vmem:[%s306 + $0x290] sm:$0xff]
        %v468 = vld [vmem:[%s306 + $0x298] sm:$0xff]
        %v469 = vld [vmem:[%s306 + $0x2a0] sm:$0xff]
        %v470 = vld [vmem:[%s306 + $0x2a8] sm:$0xff]
        %v471 = vld [vmem:[%s306 + $0x2b0] sm:$0xff]
        %v472 = vld [vmem:[%s306 + $0x2b8] sm:$0xff]
        %v473 = vld [vmem:[%s306 + $0x2c0] sm:$0xff]
        %v474 = vld [vmem:[%s306 + $0x2c8] sm:$0xff]
        %v475 = vld [vmem:[%s306 + $0x2d0] sm:$0xff]
        %v476 = vld [vmem:[%s306 + $0x2d8] sm:$0xff]
        %v477 = vld [vmem:[%s306 + $0x2e0] sm:$0xff]
        %v478 = vld [vmem:[%s306 + $0x2e8] sm:$0xff]
        %v479 = vld [vmem:[%s306 + $0x2f0] sm:$0xff]
        %v480 = vld [vmem:[%s306 + $0x2f8] sm:$0xff]
        %v481 = vld [vmem:[%s306 + $0x300] sm:$0xff]
        %v482 = vld [vmem:[%s306 + $0x308] sm:$0xff]
        %v483 = vld [vmem:[%s306 + $0x310] sm:$0xff]
        %v484 = vld [vmem:[%s306 + $0x318] sm:$0xff]
        %v485 = vld [vmem:[%s306 + $0x320] sm:$0xff]
        %v486 = vld [vmem:[%s306 + $0x328] sm:$0xff]
        %v487 = vld [vmem:[%s306 + $0x330] sm:$0xff]
        %v488 = vld [vmem:[%s306 + $0x338] sm:$0xff]
        %v489 = vld [vmem:[%s306 + $0x340] sm:$0xff]
        %v490 = vld [vmem:[%s306 + $0x348] sm:$0xff]
        %v491 = vld [vmem:[%s306 + $0x350] sm:$0xff]
        %v492 = vld [vmem:[%s306 + $0x358] sm:$0xff]
        %v493 = vld [vmem:[%s306 + $0x360] sm:$0xff]
        %v494 = vld [vmem:[%s306 + $0x368] sm:$0xff]
        %v495 = vld [vmem:[%s306 + $0x370] sm:$0xff]
        %v496 = vld [vmem:[%s306 + $0x378] sm:$0xff]
        %v497 = vld [vmem:[%s306 + $0x380] sm:$0xff]
        %v498 = vld [vmem:[%s306 + $0x388] sm:$0xff]
        %v499 = vld [vmem:[%s306 + $0x390] sm:$0xff]
        %v500 = vld [vmem:[%s306 + $0x398] sm:$0xff]
        %v501 = vld [vmem:[%s306 + $0x3a0] sm:$0xff]
        %v502 = vld [vmem:[%s306 + $0x3a8] sm:$0xff]
        %v503 = vld [vmem:[%s306 + $0x3b0] sm:$0xff]
        %v504 = vld [vmem:[%s306 + $0x3b8] sm:$0xff]
        %v505 = vld [vmem:[%s306 + $0x3c0] sm:$0xff]
        %v506 = vld [vmem:[%s306 + $0x3c8] sm:$0xff]
        %v507 = vld [vmem:[%s306 + $0x3d0] sm:$0xff]
        %v508 = vld [vmem:[%s306 + $0x3d8] sm:$0xff]
        %v509 = vld [vmem:[%s306 + $0x3e0] sm:$0xff]
        %v510 = vld [vmem:[%s306 + $0x3e8] sm:$0xff]
        %v511 = vld [vmem:[%s306 + $0x3f0] sm:$0xff]
        %v512 = vld [vmem:[%s306 + $0x3f8] sm:$0xff]
        %v513 = vld [vmem:[%s306 + $0x400] sm:$0xff]
        %v514 = vld [vmem:[%s306 + $0x408] sm:$0xff]
        %v515 = vld [vmem:[%s306 + $0x410] sm:$0xff]
        %v516 = vld [vmem:[%s306 + $0x418] sm:$0xff]
        %v517 = vld [vmem:[%s306 + $0x420] sm:$0xff]
        %v518 = vld [vmem:[%s306 + $0x428] sm:$0xff]
        %v519 = vld [vmem:[%s306 + $0x430] sm:$0xff]
        %v520 = vld [vmem:[%s306 + $0x438] sm:$0xff]
        %v521 = vld [vmem:[%s306 + $0x440] sm:$0xff]
        %v522 = vld [vmem:[%s306 + $0x448] sm:$0xff]
        %v523 = vld [vmem:[%s306 + $0x450] sm:$0xff]
        %v524 = vld [vmem:[%s306 + $0x458] sm:$0xff]
        %v525 = vld [vmem:[%s306 + $0x460] sm:$0xff]
        %v526 = vld [vmem:[%s306 + $0x468] sm:$0xff]
        %v527 = vld [vmem:[%s306 + $0x470] sm:$0xff]
        %v528 = vld [vmem:[%s306 + $0x478] sm:$0xff]
        %v529 = vld [vmem:[%s306 + $0x480] sm:$0xff]
        %v530 = vld [vmem:[%s306 + $0x488] sm:$0xff]
        %v531 = vld [vmem:[%s306 + $0x490] sm:$0xff]
        %v532 = vld [vmem:[%s306 + $0x498] sm:$0xff]
        %v533 = vld [vmem:[%s306 + $0x4a0] sm:$0xff]
        %v534 = vld [vmem:[%s306 + $0x4a8] sm:$0xff]
        %v535 = vld [vmem:[%s306 + $0x4b0] sm:$0xff]
        %v536 = vld [vmem:[%s306 + $0x4b8] sm:$0xff]
        %v537 = vld [vmem:[%s306 + $0x4c0] sm:$0xff]
        %v538 = vld [vmem:[%s306 + $0x4c8] sm:$0xff]
        %v539 = vld [vmem:[%s306 + $0x4d0] sm:$0xff]
        %v540 = vld [vmem:[%s306 + $0x4d8] sm:$0xff]
        %v541 = vld [vmem:[%s306 + $0x4e0] sm:$0xff]
        %v542 = vld [vmem:[%s306 + $0x4e8] sm:$0xff]
        %v543 = vld [vmem:[%s306 + $0x4f0] sm:$0xff]
        %v544 = vld [vmem:[%s306 + $0x4f8] sm:$0xff]
        %v545 = vld [vmem:[%s306 + $0x500] sm:$0xff]
        %v546 = vld [vmem:[%s306 + $0x508] sm:$0xff]
        %v547 = vld [vmem:[%s306 + $0x510] sm:$0xff]
        %v548 = vld [vmem:[%s306 + $0x518] sm:$0xff]
        %v549 = vld [vmem:[%s306 + $0x520] sm:$0xff]
        %v550 = vld [vmem:[%s306 + $0x528] sm:$0xff]
        %v551 = vld [vmem:[%s306 + $0x530] sm:$0xff]
        %v552 = vld [vmem:[%s306 + $0x538] sm:$0xff]
        %v553 = vld [vmem:[%s306 + $0x540] sm:$0xff]
        %v554 = vld [vmem:[%s306 + $0x548] sm:$0xff]
        %v555 = vld [vmem:[%s306 + $0x550] sm:$0xff]
        %v556 = vld [vmem:[%s306 + $0x558] sm:$0xff]
        %v557 = vld [vmem:[%s306 + $0x560] sm:$0xff]
        %v558 = vld [vmem:[%s306 + $0x568] sm:$0xff]
        %v559 = vld [vmem:[%s306 + $0x570] sm:$0xff]
        %v560 = vld [vmem:[%s306 + $0x578] sm:$0xff]
        %v561 = vld [vmem:[%s306 + $0x580] sm:$0xff]
        %v562 = vld [vmem:[%s306 + $0x588] sm:$0xff]
        %v563 = vld [vmem:[%s306 + $0x590] sm:$0xff]
        %v564 = vld [vmem:[%s306 + $0x598] sm:$0xff]
        %v565 = vld [vmem:[%s306 + $0x5a0] sm:$0xff]
        %v566 = vld [vmem:[%s306 + $0x5a8] sm:$0xff]
        %v567 = vld [vmem:[%s306 + $0x5b0] sm:$0xff]
        %v568 = vld [vmem:[%s306 + $0x5b8] sm:$0xff]
        %v569 = vld [vmem:[%s306 + $0x5c0] sm:$0xff]
        %v570 = vld [vmem:[%s306 + $0x5c8] sm:$0xff]
        %v571 = vld [vmem:[%s306 + $0x5d0] sm:$0xff]
        %v572 = vld [vmem:[%s306 + $0x5d8] sm:$0xff]
        %v573 = vld [vmem:[%s306 + $0x5e0] sm:$0xff]
        %v574 = vld [vmem:[%s306 + $0x5e8] sm:$0xff]
        %v575 = vld [vmem:[%s306 + $0x5f0] sm:$0xff]
        %v576 = vld [vmem:[%s306 + $0x5f8] sm:$0xff]
        %v577 = vld [vmem:[%s306 + $0x600] sm:$0xff]
        %v578 = vld [vmem:[%s306 + $0x608] sm:$0xff]
        %v579 = vld [vmem:[%s306 + $0x610] sm:$0xff]
        %v580 = vld [vmem:[%s306 + $0x618] sm:$0xff]
        %v581 = vld [vmem:[%s306 + $0x620] sm:$0xff]
        %v582 = vld [vmem:[%s306 + $0x628] sm:$0xff]
        %v583 = vld [vmem:[%s306 + $0x630] sm:$0xff]
        %v584 = vld [vmem:[%s306 + $0x638] sm:$0xff]
        %v585 = vld [vmem:[%s306 + $0x640] sm:$0xff]
        %v586 = vld [vmem:[%s306 + $0x648] sm:$0xff]
        %v587 = vld [vmem:[%s306 + $0x650] sm:$0xff]
        %v588 = vld [vmem:[%s306 + $0x658] sm:$0xff]
        %v589 = vld [vmem:[%s306 + $0x660] sm:$0xff]
        %v590 = vld [vmem:[%s306 + $0x668] sm:$0xff]
        %v591 = vld [vmem:[%s306 + $0x670] sm:$0xff]
        %v592 = vld [vmem:[%s306 + $0x678] sm:$0xff]
        %v593 = vld [vmem:[%s306 + $0x680] sm:$0xff]
        %v594 = vld [vmem:[%s306 + $0x688] sm:$0xff]
        %v595 = vld [vmem:[%s306 + $0x690] sm:$0xff]
        %v596 = vld [vmem:[%s306 + $0x698] sm:$0xff]
        %v597 = vld [vmem:[%s306 + $0x6a0] sm:$0xff]
        %v598 = vld [vmem:[%s306 + $0x6a8] sm:$0xff]
        %v599 = vld [vmem:[%s306 + $0x6b0] sm:$0xff]
        %v600 = vld [vmem:[%s306 + $0x6b8] sm:$0xff]
        %v601 = vld [vmem:[%s306 + $0x6c0] sm:$0xff]
        %v602 = vld [vmem:[%s306 + $0x6c8] sm:$0xff]
        %v603 = vld [vmem:[%s306 + $0x6d0] sm:$0xff]
        %v604 = vld [vmem:[%s306 + $0x6d8] sm:$0xff]
        %v605 = vld [vmem:[%s306 + $0x6e0] sm:$0xff]
        %v606 = vld [vmem:[%s306 + $0x6e8] sm:$0xff]
        %v607 = vld [vmem:[%s306 + $0x6f0] sm:$0xff]
        %v608 = vld [vmem:[%s306 + $0x6f8] sm:$0xff]
        %v609 = vld [vmem:[%s306 + $0x700] sm:$0xff]
        %v610 = vld [vmem:[%s306 + $0x708] sm:$0xff]
        %v611 = vld [vmem:[%s306 + $0x710] sm:$0xff]
        %v612 = vld [vmem:[%s306 + $0x718] sm:$0xff]
        %v613 = vld [vmem:[%s306 + $0x720] sm:$0xff]
        %v614 = vld [vmem:[%s306 + $0x728] sm:$0xff]
        %v615 = vld [vmem:[%s306 + $0x730] sm:$0xff]
        %v616 = vld [vmem:[%s306 + $0x738] sm:$0xff]
        %v617 = vld [vmem:[%s306 + $0x740] sm:$0xff]
        %v618 = vld [vmem:[%s306 + $0x748] sm:$0xff]
        %v619 = vld [vmem:[%s306 + $0x750] sm:$0xff]
        %v620 = vld [vmem:[%s306 + $0x758] sm:$0xff]
        %v621 = vld [vmem:[%s306 + $0x760] sm:$0xff]
        %v622 = vld [vmem:[%s306 + $0x768] sm:$0xff]
        %v623 = vld [vmem:[%s306 + $0x770] sm:$0xff]
        %v624 = vld [vmem:[%s306 + $0x778] sm:$0xff]
        %v625 = vld [vmem:[%s306 + $0x780] sm:$0xff]
        %v626 = vld [vmem:[%s306 + $0x788] sm:$0xff]
        %v627 = vld [vmem:[%s306 + $0x790] sm:$0xff]
        %v628 = vld [vmem:[%s306 + $0x798] sm:$0xff]
        %v629 = vld [vmem:[%s306 + $0x7a0] sm:$0xff]
        %v630 = vld [vmem:[%s306 + $0x7a8] sm:$0xff]
        %v631 = vld [vmem:[%s306 + $0x7b0] sm:$0xff]
        %v632 = vld [vmem:[%s306 + $0x7b8] sm:$0xff]
        %v633 = vld [vmem:[%s306 + $0x7c0] sm:$0xff]
        %v634 = vld [vmem:[%s306 + $0x7c8] sm:$0xff]
        %v635 = vld [vmem:[%s306 + $0x7d0] sm:$0xff]
        %v636 = vld [vmem:[%s306 + $0x7d8] sm:$0xff]
        %v637 = vld [vmem:[%s306 + $0x7e0] sm:$0xff]
        %v638 = vld [vmem:[%s306 + $0x7e8] sm:$0xff]
        %v639 = vld [vmem:[%s306 + $0x7f0] sm:$0xff]
        %v640 = vld [vmem:[%s306 + $0x7f8] sm:$0xff]
        %v641 = vld [vmem:[%s315] sm:$0xf]
        %v643 = vlaneseq
        %v644 = vshrl.u32 %v643, 7
        %v645 = vsub.s32 0, %v644
        %v646 = vrot.slane %v641, %v645
        %v647 = vlaneseq
        %v648 = vshrl.u32 %v647, 7
        %v649 = vsub.s32 1, %v648
        %v650 = vrot.slane %v641, %v649
        %v651 = vlaneseq
        %v652 = vshrl.u32 %v651, 7
        %v653 = vsub.s32 2, %v652
        %v654 = vrot.slane %v641, %v653
        %v655 = vlaneseq
        %v656 = vshrl.u32 %v655, 7
        %v657 = vsub.s32 3, %v656
        %v658 = vrot.slane %v641, %v657
        %663 = vmatprep.subr.mxu0 %v386
        %664 = vmatpush1.msra.mxu0 %v385
        %665 = vmatprep.subr.mxu0 %v390
        %666 = vmatpush1.msra.mxu0 %v389
        %667 = vmatprep.subr.mxu0 %v394
        %668 = vmatpush1.msra.mxu0 %v393
        %669 = vmatprep.subr.mxu0 %v398
        %670 = vmatpush1.msra.mxu0 %v397
        %671 = vmatprep.subr.mxu0 %v402
        %672 = vmatpush1.msra.mxu0 %v401
        %673 = vmatprep.subr.mxu0 %v406
        %674 = vmatpush1.msra.mxu0 %v405
        %675 = vmatprep.subr.mxu0 %v410
        %676 = vmatpush1.msra.mxu0 %v409
        %677 = vmatprep.subr.mxu0 %v414
        %678 = vmatpush1.msra.mxu0 %v413
        %679 = vmatprep.subr.mxu0 %v418
        %680 = vmatpush1.msra.mxu0 %v417
        %681 = vmatprep.subr.mxu0 %v422
        %682 = vmatpush1.msra.mxu0 %v421
        %683 = vmatprep.subr.mxu0 %v426
        %684 = vmatpush1.msra.mxu0 %v425
        %685 = vmatprep.subr.mxu0 %v430
        %686 = vmatpush1.msra.mxu0 %v429
        %687 = vmatprep.subr.mxu0 %v434
        %688 = vmatpush1.msra.mxu0 %v433
        %689 = vmatprep.subr.mxu0 %v438
        %690 = vmatpush1.msra.mxu0 %v437
        %691 = vmatprep.subr.mxu0 %v442
        %692 = vmatpush1.msra.mxu0 %v441
        %693 = vmatprep.subr.mxu0 %v446
        %694 = vmatpush1.msra.mxu0 %v445
        %695 = vmatprep.subr.mxu0 %v450
        %696 = vmatpush1.msra.mxu0 %v449
        %697 = vmatprep.subr.mxu0 %v454
        %698 = vmatpush1.msra.mxu0 %v453
        %699 = vmatprep.subr.mxu0 %v458
        %700 = vmatpush1.msra.mxu0 %v457
        %701 = vmatprep.subr.mxu0 %v462
        %702 = vmatpush1.msra.mxu0 %v461
        %703 = vmatprep.subr.mxu0 %v466
        %704 = vmatpush1.msra.mxu0 %v465
        %705 = vmatprep.subr.mxu0 %v470
        %706 = vmatpush1.msra.mxu0 %v469
        %707 = vmatprep.subr.mxu0 %v474
        %708 = vmatpush1.msra.mxu0 %v473
        %709 = vmatprep.subr.mxu0 %v478
        %710 = vmatpush1.msra.mxu0 %v477
        %711 = vmatprep.subr.mxu0 %v482
        %712 = vmatpush1.msra.mxu0 %v481
        %713 = vmatprep.subr.mxu0 %v486
        %714 = vmatpush1.msra.mxu0 %v485
        %715 = vmatprep.subr.mxu0 %v490
        %716 = vmatpush1.msra.mxu0 %v489
        %717 = vmatprep.subr.mxu0 %v494
        %718 = vmatpush1.msra.mxu0 %v493
        %719 = vmatprep.subr.mxu0 %v498
        %720 = vmatpush1.msra.mxu0 %v497
        %721 = vmatprep.subr.mxu0 %v502
        %722 = vmatpush1.msra.mxu0 %v501
        %723 = vmatprep.subr.mxu0 %v506
        %724 = vmatpush1.msra.mxu0 %v505
        %725 = vmatprep.subr.mxu0 %v510
        %726 = vmatpush1.msra.mxu0 %v509
        %727 = vmatprep.mubr.f32.mxu0 %v378
        %728 = vmatmul.mubr.f32.gmra.mrb[0].mxu0 %v377
        %v729 = vpop.f32.mrb[0].mxu0
        %v730 = vadd.f32 %v646, %v729
        %v731 = vpop.f32.mrb[0].mxu0
        %v732 = vadd.f32 %v650, %v731
        %733 = vmatprep.mubr.f32.mxu0 %v382
        %734 = vmatmul.mubr.f32.gmra.mrb[0].mxu0 %v381
        %v735 = vpop.f32.mrb[0].mxu0
        %v736 = vadd.f32 %v646, %v735
        %v737 = vpop.f32.mrb[0].mxu0
        %v738 = vadd.f32 %v650, %v737
        %739 = vdwg.mxu0
        %740 = vmatprep.subr.mxu0 %v514
        %741 = vmatpush1.msra.mxu0 %v513
        %742 = vmatprep.subr.mxu0 %v518
        %743 = vmatpush1.msra.mxu0 %v517
        %744 = vmatprep.subr.mxu0 %v522
        %745 = vmatpush1.msra.mxu0 %v521
        %746 = vmatprep.subr.mxu0 %v526
        %747 = vmatpush1.msra.mxu0 %v525
        %748 = vmatprep.subr.mxu0 %v530
        %749 = vmatpush1.msra.mxu0 %v529
        %750 = vmatprep.subr.mxu0 %v534
        %751 = vmatpush1.msra.mxu0 %v533
        %752 = vmatprep.subr.mxu0 %v538
        %753 = vmatpush1.msra.mxu0 %v537
        %754 = vmatprep.subr.mxu0 %v542
        %755 = vmatpush1.msra.mxu0 %v541
        %756 = vmatprep.subr.mxu0 %v546
        %757 = vmatpush1.msra.mxu0 %v545
        %758 = vmatprep.subr.mxu0 %v550
        %759 = vmatpush1.msra.mxu0 %v549
        %760 = vmatprep.subr.mxu0 %v554
        %761 = vmatpush1.msra.mxu0 %v553
        %762 = vmatprep.subr.mxu0 %v558
        %763 = vmatpush1.msra.mxu0 %v557
        %764 = vmatprep.subr.mxu0 %v562
        %765 = vmatpush1.msra.mxu0 %v561
        %766 = vmatprep.subr.mxu0 %v566
        %767 = vmatpush1.msra.mxu0 %v565
        %768 = vmatprep.subr.mxu0 %v570
        %769 = vmatpush1.msra.mxu0 %v569
        %770 = vmatprep.subr.mxu0 %v574
        %771 = vmatpush1.msra.mxu0 %v573
        %772 = vmatprep.subr.mxu0 %v578
        %773 = vmatpush1.msra.mxu0 %v577
        %774 = vmatprep.subr.mxu0 %v582
        %775 = vmatpush1.msra.mxu0 %v581
        %776 = vmatprep.subr.mxu0 %v586
        %777 = vmatpush1.msra.mxu0 %v585
        %778 = vmatprep.subr.mxu0 %v590
        %779 = vmatpush1.msra.mxu0 %v589
        %780 = vmatprep.subr.mxu0 %v594
        %781 = vmatpush1.msra.mxu0 %v593
        %782 = vmatprep.subr.mxu0 %v598
        %783 = vmatpush1.msra.mxu0 %v597
        %784 = vmatprep.subr.mxu0 %v602
        %785 = vmatpush1.msra.mxu0 %v601
        %786 = vmatprep.subr.mxu0 %v606
        %787 = vmatpush1.msra.mxu0 %v605
        %788 = vmatprep.subr.mxu0 %v610
        %789 = vmatpush1.msra.mxu0 %v609
        %790 = vmatprep.subr.mxu0 %v614
        %791 = vmatpush1.msra.mxu0 %v613
        %792 = vmatprep.subr.mxu0 %v618
        %793 = vmatpush1.msra.mxu0 %v617
        %794 = vmatprep.subr.mxu0 %v622
        %795 = vmatpush1.msra.mxu0 %v621
        %796 = vmatprep.subr.mxu0 %v626
        %797 = vmatpush1.msra.mxu0 %v625
        %798 = vmatprep.subr.mxu0 %v630
        %799 = vmatpush1.msra.mxu0 %v629
        %800 = vmatprep.subr.mxu0 %v634
        %801 = vmatpush1.msra.mxu0 %v633
        %802 = vmatprep.subr.mxu0 %v638
        %803 = vmatpush1.msra.mxu0 %v637
        %804 = vmatprep.mubr.f32.mxu0 %v380
        %805 = vmatmul.mubr.f32.gmra.mrb[0].mxu0 %v379
        %v806 = vpop.f32.mrb[0].mxu0
        %v807 = vadd.f32 %v730, %v806
        %v808 = vpop.f32.mrb[0].mxu0
        %v809 = vadd.f32 %v732, %v808
        %810 = vmatprep.mubr.f32.mxu0 %v384
        %811 = vmatmul.mubr.f32.gmra.mrb[0].mxu0 %v383
        %v812 = vpop.f32.mrb[0].mxu0
        %v813 = vadd.f32 %v736, %v812
        %v814 = vpop.f32.mrb[0].mxu0
        %v815 = vadd.f32 %v738, %v814
        %816 = vdwg.mxu0
        %817 = vmatprep.subr.mxu0 %v388
        %818 = vmatpush1.msra.mxu0 %v387
        %819 = vmatprep.subr.mxu0 %v392
        %820 = vmatpush1.msra.mxu0 %v391
        %821 = vmatprep.subr.mxu0 %v396
        %822 = vmatpush1.msra.mxu0 %v395
        %823 = vmatprep.subr.mxu0 %v400
        %824 = vmatpush1.msra.mxu0 %v399
        %825 = vmatprep.subr.mxu0 %v404
        %826 = vmatpush1.msra.mxu0 %v403
        %827 = vmatprep.subr.mxu0 %v408
        %828 = vmatpush1.msra.mxu0 %v407
        %829 = vmatprep.subr.mxu0 %v412
        %830 = vmatpush1.msra.mxu0 %v411
        %831 = vmatprep.subr.mxu0 %v416
        %832 = vmatpush1.msra.mxu0 %v415
        %833 = vmatprep.subr.mxu0 %v420
        %834 = vmatpush1.msra.mxu0 %v419
        %835 = vmatprep.subr.mxu0 %v424
        %836 = vmatpush1.msra.mxu0 %v423
        %837 = vmatprep.subr.mxu0 %v428
        %838 = vmatpush1.msra.mxu0 %v427
        %839 = vmatprep.subr.mxu0 %v432
        %840 = vmatpush1.msra.mxu0 %v431
        %841 = vmatprep.subr.mxu0 %v436
        %842 = vmatpush1.msra.mxu0 %v435
        %843 = vmatprep.subr.mxu0 %v440
        %844 = vmatpush1.msra.mxu0 %v439
        %845 = vmatprep.subr.mxu0 %v444
        %846 = vmatpush1.msra.mxu0 %v443
        %847 = vmatprep.subr.mxu0 %v448
        %848 = vmatpush1.msra.mxu0 %v447
        %849 = vmatprep.subr.mxu0 %v452
        %850 = vmatpush1.msra.mxu0 %v451
        %851 = vmatprep.subr.mxu0 %v456
        %852 = vmatpush1.msra.mxu0 %v455
        %853 = vmatprep.subr.mxu0 %v460
        %854 = vmatpush1.msra.mxu0 %v459
        %855 = vmatprep.subr.mxu0 %v464
        %856 = vmatpush1.msra.mxu0 %v463
        %857 = vmatprep.subr.mxu0 %v468
        %858 = vmatpush1.msra.mxu0 %v467
        %859 = vmatprep.subr.mxu0 %v472
        %860 = vmatpush1.msra.mxu0 %v471
        %861 = vmatprep.subr.mxu0 %v476
        %862 = vmatpush1.msra.mxu0 %v475
        %863 = vmatprep.subr.mxu0 %v480
        %864 = vmatpush1.msra.mxu0 %v479
        %865 = vmatprep.subr.mxu0 %v484
        %866 = vmatpush1.msra.mxu0 %v483
        %867 = vmatprep.subr.mxu0 %v488
        %868 = vmatpush1.msra.mxu0 %v487
        %869 = vmatprep.subr.mxu0 %v492
        %870 = vmatpush1.msra.mxu0 %v491
        %871 = vmatprep.subr.mxu0 %v496
        %872 = vmatpush1.msra.mxu0 %v495
        %873 = vmatprep.subr.mxu0 %v500
        %874 = vmatpush1.msra.mxu0 %v499
        %875 = vmatprep.subr.mxu0 %v504
        %876 = vmatpush1.msra.mxu0 %v503
        %877 = vmatprep.subr.mxu0 %v508
        %878 = vmatpush1.msra.mxu0 %v507
        %879 = vmatprep.subr.mxu0 %v512
        %880 = vmatpush1.msra.mxu0 %v511
        %881 = vmatprep.mubr.f32.mxu0 %v378
        %882 = vmatmul.mubr.f32.gmra.mrb[0].mxu0 %v377
        %v883 = vpop.f32.mrb[0].mxu0
        %v884 = vadd.f32 %v654, %v883
        %v885 = vpop.f32.mrb[0].mxu0
        %v886 = vadd.f32 %v658, %v885
        %887 = vmatprep.mubr.f32.mxu0 %v382
        %888 = vmatmul.mubr.f32.gmra.mrb[0].mxu0 %v381
        %v889 = vpop.f32.mrb[0].mxu0
        %v890 = vadd.f32 %v654, %v889
        %v891 = vpop.f32.mrb[0].mxu0
        %v892 = vadd.f32 %v658, %v891
        %893 = vdwg.mxu0
        %894 = vmatprep.subr.mxu0 %v516
        %895 = vmatpush1.msra.mxu0 %v515
        %896 = vmatprep.subr.mxu0 %v520
        %897 = vmatpush1.msra.mxu0 %v519
        %898 = vmatprep.subr.mxu0 %v524
        %899 = vmatpush1.msra.mxu0 %v523
        %900 = vmatprep.subr.mxu0 %v528
        %901 = vmatpush1.msra.mxu0 %v527
        %902 = vmatprep.subr.mxu0 %v532
        %903 = vmatpush1.msra.mxu0 %v531
        %904 = vmatprep.subr.mxu0 %v536
        %905 = vmatpush1.msra.mxu0 %v535
        %906 = vmatprep.subr.mxu0 %v540
        %907 = vmatpush1.msra.mxu0 %v539
        %908 = vmatprep.subr.mxu0 %v544
        %909 = vmatpush1.msra.mxu0 %v543
        %910 = vmatprep.subr.mxu0 %v548
        %911 = vmatpush1.msra.mxu0 %v547
        %912 = vmatprep.subr.mxu0 %v552
        %913 = vmatpush1.msra.mxu0 %v551
        %914 = vmatprep.subr.mxu0 %v556
        %915 = vmatpush1.msra.mxu0 %v555
        %916 = vmatprep.subr.mxu0 %v560
        %917 = vmatpush1.msra.mxu0 %v559
        %918 = vmatprep.subr.mxu0 %v564
        %919 = vmatpush1.msra.mxu0 %v563
        %920 = vmatprep.subr.mxu0 %v568
        %921 = vmatpush1.msra.mxu0 %v567
        %922 = vmatprep.subr.mxu0 %v572
        %923 = vmatpush1.msra.mxu0 %v571
        %924 = vmatprep.subr.mxu0 %v576
        %925 = vmatpush1.msra.mxu0 %v575
        %926 = vmatprep.subr.mxu0 %v580
        %927 = vmatpush1.msra.mxu0 %v579
        %928 = vmatprep.subr.mxu0 %v584
        %929 = vmatpush1.msra.mxu0 %v583
        %930 = vmatprep.subr.mxu0 %v588
        %931 = vmatpush1.msra.mxu0 %v587
        %932 = vmatprep.subr.mxu0 %v592
        %933 = vmatpush1.msra.mxu0 %v591
        %934 = vmatprep.subr.mxu0 %v596
        %935 = vmatpush1.msra.mxu0 %v595
        %936 = vmatprep.subr.mxu0 %v600
        %937 = vmatpush1.msra.mxu0 %v599
        %938 = vmatprep.subr.mxu0 %v604
        %939 = vmatpush1.msra.mxu0 %v603
        %940 = vmatprep.subr.mxu0 %v608
        %941 = vmatpush1.msra.mxu0 %v607
        %942 = vmatprep.subr.mxu0 %v612
        %943 = vmatpush1.msra.mxu0 %v611
        %944 = vmatprep.subr.mxu0 %v616
        %945 = vmatpush1.msra.mxu0 %v615
        %946 = vmatprep.subr.mxu0 %v620
        %947 = vmatpush1.msra.mxu0 %v619
        %948 = vmatprep.subr.mxu0 %v624
        %949 = vmatpush1.msra.mxu0 %v623
        %950 = vmatprep.subr.mxu0 %v628
        %951 = vmatpush1.msra.mxu0 %v627
        %952 = vmatprep.subr.mxu0 %v632
        %953 = vmatpush1.msra.mxu0 %v631
        %954 = vmatprep.subr.mxu0 %v636
        %955 = vmatpush1.msra.mxu0 %v635
        %956 = vmatprep.subr.mxu0 %v640
        %957 = vmatpush1.msra.mxu0 %v639
        %958 = vmatprep.mubr.f32.mxu0 %v380
        %959 = vmatmul.mubr.f32.gmra.mrb[0].mxu0 %v379
        %v960 = vpop.f32.mrb[0].mxu0
        %v961 = vadd.f32 %v884, %v960
        %v962 = vpop.f32.mrb[0].mxu0
        %v963 = vadd.f32 %v886, %v962
        %964 = vmatprep.mubr.f32.mxu0 %v384
        %965 = vmatmul.mubr.f32.gmra.mrb[0].mxu0 %v383
        %v966 = vpop.f32.mrb[0].mxu0
        %v967 = vadd.f32 %v890, %v966
        %v968 = vpop.f32.mrb[0].mxu0
        %v969 = vadd.f32 %v892, %v968
        %970 = vdwg.mxu0
        %v971 = vmax.f32 %v807, 0.0
        %v972 = vmax.f32 %v809, 0.0
        %v973 = vmax.f32 %v961, 0.0
        %v974 = vmax.f32 %v963, 0.0
        %v975 = vmax.f32 %v813, 0.0
        %v976 = vmax.f32 %v815, 0.0
        %v977 = vmax.f32 %v967, 0.0
        %v978 = vmax.f32 %v969, 0.0
        %v979 = vld [vmem:[#allocation2] sm:$0xff]
        %v980 = vld [vmem:[#allocation2 + $0x8] sm:$0xff]
        %v981 = vld [vmem:[#allocation2 + $0x10] sm:$0xff]
        %v982 = vld [vmem:[#allocation2 + $0x18] sm:$0xff]
        %v983 = vld [vmem:[#allocation2 + $0x20] sm:$0xff]
        %v984 = vld [vmem:[#allocation2 + $0x28] sm:$0xff]
        %v985 = vld [vmem:[#allocation2 + $0x30] sm:$0xff]
        %v986 = vld [vmem:[#allocation2 + $0x38] sm:$0xff]
        %v987 = vld [vmem:[%s324] sm:$0xff]
        %v988 = vld [vmem:[%s324 + $0x8] sm:$0xff]
        %v989 = vld [vmem:[%s324 + $0x10] sm:$0xff]
        %v990 = vld [vmem:[%s324 + $0x18] sm:$0xff]
        %v991 = vld [vmem:[%s324 + $0x20] sm:$0xff]
        %v992 = vld [vmem:[%s324 + $0x28] sm:$0xff]
        %v993 = vld [vmem:[%s324 + $0x30] sm:$0xff]
        %v994 = vld [vmem:[%s324 + $0x38] sm:$0xff]
        %v995 = vld [vmem:[%s324 + $0x40] sm:$0xff]
        %v996 = vld [vmem:[%s324 + $0x48] sm:$0xff]
        %v997 = vld [vmem:[%s324 + $0x50] sm:$0xff]
        %v998 = vld [vmem:[%s324 + $0x58] sm:$0xff]
        %v999 = vld [vmem:[%s324 + $0x60] sm:$0xff]
        %v1000 = vld [vmem:[%s324 + $0x68] sm:$0xff]
        %v1001 = vld [vmem:[%s324 + $0x70] sm:$0xff]
        %v1002 = vld [vmem:[%s324 + $0x78] sm:$0xff]
        %v1003 = vld [vmem:[%s324 + $0x80] sm:$0xff]
        %v1004 = vld [vmem:[%s324 + $0x88] sm:$0xff]
        %v1005 = vld [vmem:[%s324 + $0x90] sm:$0xff]
        %v1006 = vld [vmem:[%s324 + $0x98] sm:$0xff]
        %v1007 = vld [vmem:[%s324 + $0xa0] sm:$0xff]
        %v1008 = vld [vmem:[%s324 + $0xa8] sm:$0xff]
        %v1009 = vld [vmem:[%s324 + $0xb0] sm:$0xff]
        %v1010 = vld [vmem:[%s324 + $0xb8] sm:$0xff]
        %v1011 = vld [vmem:[%s324 + $0xc0] sm:$0xff]
        %v1012 = vld [vmem:[%s324 + $0xc8] sm:$0xff]
        %v1013 = vld [vmem:[%s324 + $0xd0] sm:$0xff]
        %v1014 = vld [vmem:[%s324 + $0xd8] sm:$0xff]
        %v1015 = vld [vmem:[%s324 + $0xe0] sm:$0xff]
        %v1016 = vld [vmem:[%s324 + $0xe8] sm:$0xff]
        %v1017 = vld [vmem:[%s324 + $0xf0] sm:$0xff]
        %v1018 = vld [vmem:[%s324 + $0xf8] sm:$0xff]
        %v1019 = vld [vmem:[%s324 + $0x100] sm:$0xff]
        %v1020 = vld [vmem:[%s324 + $0x108] sm:$0xff]
        %v1021 = vld [vmem:[%s324 + $0x110] sm:$0xff]
        %v1022 = vld [vmem:[%s324 + $0x118] sm:$0xff]
        %v1023 = vld [vmem:[%s324 + $0x120] sm:$0xff]
        %v1024 = vld [vmem:[%s324 + $0x128] sm:$0xff]
        %v1025 = vld [vmem:[%s324 + $0x130] sm:$0xff]
        %v1026 = vld [vmem:[%s324 + $0x138] sm:$0xff]
        %v1027 = vld [vmem:[%s324 + $0x140] sm:$0xff]
        %v1028 = vld [vmem:[%s324 + $0x148] sm:$0xff]
        %v1029 = vld [vmem:[%s324 + $0x150] sm:$0xff]
        %v1030 = vld [vmem:[%s324 + $0x158] sm:$0xff]
        %v1031 = vld [vmem:[%s324 + $0x160] sm:$0xff]
        %v1032 = vld [vmem:[%s324 + $0x168] sm:$0xff]
        %v1033 = vld [vmem:[%s324 + $0x170] sm:$0xff]
        %v1034 = vld [vmem:[%s324 + $0x178] sm:$0xff]
        %v1035 = vld [vmem:[%s324 + $0x180] sm:$0xff]
        %v1036 = vld [vmem:[%s324 + $0x188] sm:$0xff]
        %v1037 = vld [vmem:[%s324 + $0x190] sm:$0xff]
        %v1038 = vld [vmem:[%s324 + $0x198] sm:$0xff]
        %v1039 = vld [vmem:[%s324 + $0x1a0] sm:$0xff]
        %v1040 = vld [vmem:[%s324 + $0x1a8] sm:$0xff]
        %v1041 = vld [vmem:[%s324 + $0x1b0] sm:$0xff]
        %v1042 = vld [vmem:[%s324 + $0x1b8] sm:$0xff]
        %v1043 = vld [vmem:[%s324 + $0x1c0] sm:$0xff]
        %v1044 = vld [vmem:[%s324 + $0x1c8] sm:$0xff]
        %v1045 = vld [vmem:[%s324 + $0x1d0] sm:$0xff]
        %v1046 = vld [vmem:[%s324 + $0x1d8] sm:$0xff]
        %v1047 = vld [vmem:[%s324 + $0x1e0] sm:$0xff]
        %v1048 = vld [vmem:[%s324 + $0x1e8] sm:$0xff]
        %v1049 = vld [vmem:[%s324 + $0x1f0] sm:$0xff]
        %v1050 = vld [vmem:[%s324 + $0x1f8] sm:$0xff]
        %v1051 = vld [vmem:[%s324 + $0x200] sm:$0xff]
        %v1052 = vld [vmem:[%s324 + $0x208] sm:$0xff]
        %v1053 = vld [vmem:[%s324 + $0x210] sm:$0xff]
        %v1054 = vld [vmem:[%s324 + $0x218] sm:$0xff]
        %v1055 = vld [vmem:[%s324 + $0x220] sm:$0xff]
        %v1056 = vld [vmem:[%s324 + $0x228] sm:$0xff]
        %v1057 = vld [vmem:[%s324 + $0x230] sm:$0xff]
        %v1058 = vld [vmem:[%s324 + $0x238] sm:$0xff]
        %v1059 = vld [vmem:[%s324 + $0x240] sm:$0xff]
        %v1060 = vld [vmem:[%s324 + $0x248] sm:$0xff]
        %v1061 = vld [vmem:[%s324 + $0x250] sm:$0xff]
        %v1062 = vld [vmem:[%s324 + $0x258] sm:$0xff]
        %v1063 = vld [vmem:[%s324 + $0x260] sm:$0xff]
        %v1064 = vld [vmem:[%s324 + $0x268] sm:$0xff]
        %v1065 = vld [vmem:[%s324 + $0x270] sm:$0xff]
        %v1066 = vld [vmem:[%s324 + $0x278] sm:$0xff]
        %v1067 = vld [vmem:[%s324 + $0x280] sm:$0xff]
        %v1068 = vld [vmem:[%s324 + $0x288] sm:$0xff]
        %v1069 = vld [vmem:[%s324 + $0x290] sm:$0xff]
        %v1070 = vld [vmem:[%s324 + $0x298] sm:$0xff]
        %v1071 = vld [vmem:[%s324 + $0x2a0] sm:$0xff]
        %v1072 = vld [vmem:[%s324 + $0x2a8] sm:$0xff]
        %v1073 = vld [vmem:[%s324 + $0x2b0] sm:$0xff]
        %v1074 = vld [vmem:[%s324 + $0x2b8] sm:$0xff]
        %v1075 = vld [vmem:[%s324 + $0x2c0] sm:$0xff]
        %v1076 = vld [vmem:[%s324 + $0x2c8] sm:$0xff]
        %v1077 = vld [vmem:[%s324 + $0x2d0] sm:$0xff]
        %v1078 = vld [vmem:[%s324 + $0x2d8] sm:$0xff]
        %v1079 = vld [vmem:[%s324 + $0x2e0] sm:$0xff]
        %v1080 = vld [vmem:[%s324 + $0x2e8] sm:$0xff]
        %v1081 = vld [vmem:[%s324 + $0x2f0] sm:$0xff]
        %v1082 = vld [vmem:[%s324 + $0x2f8] sm:$0xff]
        %v1083 = vld [vmem:[%s324 + $0x300] sm:$0xff]
        %v1084 = vld [vmem:[%s324 + $0x308] sm:$0xff]
        %v1085 = vld [vmem:[%s324 + $0x310] sm:$0xff]
        %v1086 = vld [vmem:[%s324 + $0x318] sm:$0xff]
        %v1087 = vld [vmem:[%s324 + $0x320] sm:$0xff]
        %v1088 = vld [vmem:[%s324 + $0x328] sm:$0xff]
        %v1089 = vld [vmem:[%s324 + $0x330] sm:$0xff]
        %v1090 = vld [vmem:[%s324 + $0x338] sm:$0xff]
        %v1091 = vld [vmem:[%s324 + $0x340] sm:$0xff]
        %v1092 = vld [vmem:[%s324 + $0x348] sm:$0xff]
        %v1093 = vld [vmem:[%s324 + $0x350] sm:$0xff]
        %v1094 = vld [vmem:[%s324 + $0x358] sm:$0xff]
        %v1095 = vld [vmem:[%s324 + $0x360] sm:$0xff]
        %v1096 = vld [vmem:[%s324 + $0x368] sm:$0xff]
        %v1097 = vld [vmem:[%s324 + $0x370] sm:$0xff]
        %v1098 = vld [vmem:[%s324 + $0x378] sm:$0xff]
        %v1099 = vld [vmem:[%s324 + $0x380] sm:$0xff]
        %v1100 = vld [vmem:[%s324 + $0x388] sm:$0xff]
        %v1101 = vld [vmem:[%s324 + $0x390] sm:$0xff]
        %v1102 = vld [vmem:[%s324 + $0x398] sm:$0xff]
        %v1103 = vld [vmem:[%s324 + $0x3a0] sm:$0xff]
        %v1104 = vld [vmem:[%s324 + $0x3a8] sm:$0xff]
        %v1105 = vld [vmem:[%s324 + $0x3b0] sm:$0xff]
        %v1106 = vld [vmem:[%s324 + $0x3b8] sm:$0xff]
        %v1107 = vld [vmem:[%s324 + $0x3c0] sm:$0xff]
        %v1108 = vld [vmem:[%s324 + $0x3c8] sm:$0xff]
        %v1109 = vld [vmem:[%s324 + $0x3d0] sm:$0xff]
        %v1110 = vld [vmem:[%s324 + $0x3d8] sm:$0xff]
        %v1111 = vld [vmem:[%s324 + $0x3e0] sm:$0xff]
        %v1112 = vld [vmem:[%s324 + $0x3e8] sm:$0xff]
        %v1113 = vld [vmem:[%s324 + $0x3f0] sm:$0xff]
        %v1114 = vld [vmem:[%s324 + $0x3f8] sm:$0xff]
        %v1115 = vld [vmem:[%s324 + $0x400] sm:$0xff]
        %v1116 = vld [vmem:[%s324 + $0x408] sm:$0xff]
        %v1117 = vld [vmem:[%s324 + $0x410] sm:$0xff]
        %v1118 = vld [vmem:[%s324 + $0x418] sm:$0xff]
        %v1119 = vld [vmem:[%s324 + $0x420] sm:$0xff]
        %v1120 = vld [vmem:[%s324 + $0x428] sm:$0xff]
        %v1121 = vld [vmem:[%s324 + $0x430] sm:$0xff]
        %v1122 = vld [vmem:[%s324 + $0x438] sm:$0xff]
        %v1123 = vld [vmem:[%s324 + $0x440] sm:$0xff]
        %v1124 = vld [vmem:[%s324 + $0x448] sm:$0xff]
        %v1125 = vld [vmem:[%s324 + $0x450] sm:$0xff]
        %v1126 = vld [vmem:[%s324 + $0x458] sm:$0xff]
        %v1127 = vld [vmem:[%s324 + $0x460] sm:$0xff]
        %v1128 = vld [vmem:[%s324 + $0x468] sm:$0xff]
        %v1129 = vld [vmem:[%s324 + $0x470] sm:$0xff]
        %v1130 = vld [vmem:[%s324 + $0x478] sm:$0xff]
        %v1131 = vld [vmem:[%s324 + $0x480] sm:$0xff]
        %v1132 = vld [vmem:[%s324 + $0x488] sm:$0xff]
        %v1133 = vld [vmem:[%s324 + $0x490] sm:$0xff]
        %v1134 = vld [vmem:[%s324 + $0x498] sm:$0xff]
        %v1135 = vld [vmem:[%s324 + $0x4a0] sm:$0xff]
        %v1136 = vld [vmem:[%s324 + $0x4a8] sm:$0xff]
        %v1137 = vld [vmem:[%s324 + $0x4b0] sm:$0xff]
        %v1138 = vld [vmem:[%s324 + $0x4b8] sm:$0xff]
        %v1139 = vld [vmem:[%s324 + $0x4c0] sm:$0xff]
        %v1140 = vld [vmem:[%s324 + $0x4c8] sm:$0xff]
        %v1141 = vld [vmem:[%s324 + $0x4d0] sm:$0xff]
        %v1142 = vld [vmem:[%s324 + $0x4d8] sm:$0xff]
        %v1143 = vld [vmem:[%s324 + $0x4e0] sm:$0xff]
        %v1144 = vld [vmem:[%s324 + $0x4e8] sm:$0xff]
        %v1145 = vld [vmem:[%s324 + $0x4f0] sm:$0xff]
        %v1146 = vld [vmem:[%s324 + $0x4f8] sm:$0xff]
        %v1147 = vld [vmem:[%s324 + $0x500] sm:$0xff]
        %v1148 = vld [vmem:[%s324 + $0x508] sm:$0xff]
        %v1149 = vld [vmem:[%s324 + $0x510] sm:$0xff]
        %v1150 = vld [vmem:[%s324 + $0x518] sm:$0xff]
        %v1151 = vld [vmem:[%s324 + $0x520] sm:$0xff]
        %v1152 = vld [vmem:[%s324 + $0x528] sm:$0xff]
        %v1153 = vld [vmem:[%s324 + $0x530] sm:$0xff]
        %v1154 = vld [vmem:[%s324 + $0x538] sm:$0xff]
        %v1155 = vld [vmem:[%s324 + $0x540] sm:$0xff]
        %v1156 = vld [vmem:[%s324 + $0x548] sm:$0xff]
        %v1157 = vld [vmem:[%s324 + $0x550] sm:$0xff]
        %v1158 = vld [vmem:[%s324 + $0x558] sm:$0xff]
        %v1159 = vld [vmem:[%s324 + $0x560] sm:$0xff]
        %v1160 = vld [vmem:[%s324 + $0x568] sm:$0xff]
        %v1161 = vld [vmem:[%s324 + $0x570] sm:$0xff]
        %v1162 = vld [vmem:[%s324 + $0x578] sm:$0xff]
        %v1163 = vld [vmem:[%s324 + $0x580] sm:$0xff]
        %v1164 = vld [vmem:[%s324 + $0x588] sm:$0xff]
        %v1165 = vld [vmem:[%s324 + $0x590] sm:$0xff]
        %v1166 = vld [vmem:[%s324 + $0x598] sm:$0xff]
        %v1167 = vld [vmem:[%s324 + $0x5a0] sm:$0xff]
        %v1168 = vld [vmem:[%s324 + $0x5a8] sm:$0xff]
        %v1169 = vld [vmem:[%s324 + $0x5b0] sm:$0xff]
        %v1170 = vld [vmem:[%s324 + $0x5b8] sm:$0xff]
        %v1171 = vld [vmem:[%s324 + $0x5c0] sm:$0xff]
        %v1172 = vld [vmem:[%s324 + $0x5c8] sm:$0xff]
        %v1173 = vld [vmem:[%s324 + $0x5d0] sm:$0xff]
        %v1174 = vld [vmem:[%s324 + $0x5d8] sm:$0xff]
        %v1175 = vld [vmem:[%s324 + $0x5e0] sm:$0xff]
        %v1176 = vld [vmem:[%s324 + $0x5e8] sm:$0xff]
        %v1177 = vld [vmem:[%s324 + $0x5f0] sm:$0xff]
        %v1178 = vld [vmem:[%s324 + $0x5f8] sm:$0xff]
        %v1179 = vld [vmem:[%s324 + $0x600] sm:$0xff]
        %v1180 = vld [vmem:[%s324 + $0x608] sm:$0xff]
        %v1181 = vld [vmem:[%s324 + $0x610] sm:$0xff]
        %v1182 = vld [vmem:[%s324 + $0x618] sm:$0xff]
        %v1183 = vld [vmem:[%s324 + $0x620] sm:$0xff]
        %v1184 = vld [vmem:[%s324 + $0x628] sm:$0xff]
        %v1185 = vld [vmem:[%s324 + $0x630] sm:$0xff]
        %v1186 = vld [vmem:[%s324 + $0x638] sm:$0xff]
        %v1187 = vld [vmem:[%s324 + $0x640] sm:$0xff]
        %v1188 = vld [vmem:[%s324 + $0x648] sm:$0xff]
        %v1189 = vld [vmem:[%s324 + $0x650] sm:$0xff]
        %v1190 = vld [vmem:[%s324 + $0x658] sm:$0xff]
        %v1191 = vld [vmem:[%s324 + $0x660] sm:$0xff]
        %v1192 = vld [vmem:[%s324 + $0x668] sm:$0xff]
        %v1193 = vld [vmem:[%s324 + $0x670] sm:$0xff]
        %v1194 = vld [vmem:[%s324 + $0x678] sm:$0xff]
        %v1195 = vld [vmem:[%s324 + $0x680] sm:$0xff]
        %v1196 = vld [vmem:[%s324 + $0x688] sm:$0xff]
        %v1197 = vld [vmem:[%s324 + $0x690] sm:$0xff]
        %v1198 = vld [vmem:[%s324 + $0x698] sm:$0xff]
        %v1199 = vld [vmem:[%s324 + $0x6a0] sm:$0xff]
        %v1200 = vld [vmem:[%s324 + $0x6a8] sm:$0xff]
        %v1201 = vld [vmem:[%s324 + $0x6b0] sm:$0xff]
        %v1202 = vld [vmem:[%s324 + $0x6b8] sm:$0xff]
        %v1203 = vld [vmem:[%s324 + $0x6c0] sm:$0xff]
        %v1204 = vld [vmem:[%s324 + $0x6c8] sm:$0xff]
        %v1205 = vld [vmem:[%s324 + $0x6d0] sm:$0xff]
        %v1206 = vld [vmem:[%s324 + $0x6d8] sm:$0xff]
        %v1207 = vld [vmem:[%s324 + $0x6e0] sm:$0xff]
        %v1208 = vld [vmem:[%s324 + $0x6e8] sm:$0xff]
        %v1209 = vld [vmem:[%s324 + $0x6f0] sm:$0xff]
        %v1210 = vld [vmem:[%s324 + $0x6f8] sm:$0xff]
        %v1211 = vld [vmem:[%s324 + $0x700] sm:$0xff]
        %v1212 = vld [vmem:[%s324 + $0x708] sm:$0xff]
        %v1213 = vld [vmem:[%s324 + $0x710] sm:$0xff]
        %v1214 = vld [vmem:[%s324 + $0x718] sm:$0xff]
        %v1215 = vld [vmem:[%s324 + $0x720] sm:$0xff]
        %v1216 = vld [vmem:[%s324 + $0x728] sm:$0xff]
        %v1217 = vld [vmem:[%s324 + $0x730] sm:$0xff]
        %v1218 = vld [vmem:[%s324 + $0x738] sm:$0xff]
        %v1219 = vld [vmem:[%s324 + $0x740] sm:$0xff]
        %v1220 = vld [vmem:[%s324 + $0x748] sm:$0xff]
        %v1221 = vld [vmem:[%s324 + $0x750] sm:$0xff]
        %v1222 = vld [vmem:[%s324 + $0x758] sm:$0xff]
        %v1223 = vld [vmem:[%s324 + $0x760] sm:$0xff]
        %v1224 = vld [vmem:[%s324 + $0x768] sm:$0xff]
        %v1225 = vld [vmem:[%s324 + $0x770] sm:$0xff]
        %v1226 = vld [vmem:[%s324 + $0x778] sm:$0xff]
        %v1227 = vld [vmem:[%s324 + $0x780] sm:$0xff]
        %v1228 = vld [vmem:[%s324 + $0x788] sm:$0xff]
        %v1229 = vld [vmem:[%s324 + $0x790] sm:$0xff]
        %v1230 = vld [vmem:[%s324 + $0x798] sm:$0xff]
        %v1231 = vld [vmem:[%s324 + $0x7a0] sm:$0xff]
        %v1232 = vld [vmem:[%s324 + $0x7a8] sm:$0xff]
        %v1233 = vld [vmem:[%s324 + $0x7b0] sm:$0xff]
        %v1234 = vld [vmem:[%s324 + $0x7b8] sm:$0xff]
        %v1235 = vld [vmem:[%s324 + $0x7c0] sm:$0xff]
        %v1236 = vld [vmem:[%s324 + $0x7c8] sm:$0xff]
        %v1237 = vld [vmem:[%s324 + $0x7d0] sm:$0xff]
        %v1238 = vld [vmem:[%s324 + $0x7d8] sm:$0xff]
        %v1239 = vld [vmem:[%s324 + $0x7e0] sm:$0xff]
        %v1240 = vld [vmem:[%s324 + $0x7e8] sm:$0xff]
        %v1241 = vld [vmem:[%s324 + $0x7f0] sm:$0xff]
        %v1242 = vld [vmem:[%s324 + $0x7f8] sm:$0xff]
        %1243 = vmatprep.subr.mxu0 %v988
        %1244 = vmatpush1.msra.mxu0 %v987
        %1245 = vmatprep.subr.mxu0 %v992
        %1246 = vmatpush1.msra.mxu0 %v991
        %1247 = vmatprep.subr.mxu0 %v996
        %1248 = vmatpush1.msra.mxu0 %v995
        %1249 = vmatprep.subr.mxu0 %v1000
        %1250 = vmatpush1.msra.mxu0 %v999
        %1251 = vmatprep.subr.mxu0 %v1004
        %1252 = vmatpush1.msra.mxu0 %v1003
        %1253 = vmatprep.subr.mxu0 %v1008
        %1254 = vmatpush1.msra.mxu0 %v1007
        %1255 = vmatprep.subr.mxu0 %v1012
        %1256 = vmatpush1.msra.mxu0 %v1011
        %1257 = vmatprep.subr.mxu0 %v1016
        %1258 = vmatpush1.msra.mxu0 %v1015
        %1259 = vmatprep.subr.mxu0 %v1020
        %1260 = vmatpush1.msra.mxu0 %v1019
        %1261 = vmatprep.subr.mxu0 %v1024
        %1262 = vmatpush1.msra.mxu0 %v1023
        %1263 = vmatprep.subr.mxu0 %v1028
        %1264 = vmatpush1.msra.mxu0 %v1027
        %1265 = vmatprep.subr.mxu0 %v1032
        %1266 = vmatpush1.msra.mxu0 %v1031
        %1267 = vmatprep.subr.mxu0 %v1036
        %1268 = vmatpush1.msra.mxu0 %v1035
        %1269 = vmatprep.subr.mxu0 %v1040
        %1270 = vmatpush1.msra.mxu0 %v1039
        %1271 = vmatprep.subr.mxu0 %v1044
        %1272 = vmatpush1.msra.mxu0 %v1043
        %1273 = vmatprep.subr.mxu0 %v1048
        %1274 = vmatpush1.msra.mxu0 %v1047
        %1275 = vmatprep.subr.mxu0 %v1052
        %1276 = vmatpush1.msra.mxu0 %v1051
        %1277 = vmatprep.subr.mxu0 %v1056
        %1278 = vmatpush1.msra.mxu0 %v1055
        %1279 = vmatprep.subr.mxu0 %v1060
        %1280 = vmatpush1.msra.mxu0 %v1059
        %1281 = vmatprep.subr.mxu0 %v1064
        %1282 = vmatpush1.msra.mxu0 %v1063
        %1283 = vmatprep.subr.mxu0 %v1068
        %1284 = vmatpush1.msra.mxu0 %v1067
        %1285 = vmatprep.subr.mxu0 %v1072
        %1286 = vmatpush1.msra.mxu0 %v1071
        %1287 = vmatprep.subr.mxu0 %v1076
        %1288 = vmatpush1.msra.mxu0 %v1075
        %1289 = vmatprep.subr.mxu0 %v1080
        %1290 = vmatpush1.msra.mxu0 %v1079
        %1291 = vmatprep.subr.mxu0 %v1084
        %1292 = vmatpush1.msra.mxu0 %v1083
        %1293 = vmatprep.subr.mxu0 %v1088
        %1294 = vmatpush1.msra.mxu0 %v1087
        %1295 = vmatprep.subr.mxu0 %v1092
        %1296 = vmatpush1.msra.mxu0 %v1091
        %1297 = vmatprep.subr.mxu0 %v1096
        %1298 = vmatpush1.msra.mxu0 %v1095
        %1299 = vmatprep.subr.mxu0 %v1100
        %1300 = vmatpush1.msra.mxu0 %v1099
        %1301 = vmatprep.subr.mxu0 %v1104
        %1302 = vmatpush1.msra.mxu0 %v1103
        %1303 = vmatprep.subr.mxu0 %v1108
        %1304 = vmatpush1.msra.mxu0 %v1107
        %1305 = vmatprep.subr.mxu0 %v1112
        %1306 = vmatpush1.msra.mxu0 %v1111
        %1307 = vmatprep.mubr.f32.mxu0 %v972
        %1308 = vmatmul.mubr.f32.gmra.mrb[0].mxu0 %v971
        %v1309 = vpop.f32.mrb[0].mxu0
        %v1310 = vadd.f32 0.0, %v1309
        %v1311 = vpop.f32.mrb[0].mxu0
        %v1312 = vadd.f32 0.0, %v1311
        %1313 = vmatprep.mubr.f32.mxu0 %v976
        %1314 = vmatmul.mubr.f32.gmra.mrb[0].mxu0 %v975
        %v1315 = vpop.f32.mrb[0].mxu0
        %v1316 = vadd.f32 0.0, %v1315
        %v1317 = vpop.f32.mrb[0].mxu0
        %v1318 = vadd.f32 0.0, %v1317
        %1319 = vdwg.mxu0
        %1320 = vmatprep.subr.mxu0 %v1116
        %1321 = vmatpush1.msra.mxu0 %v1115
        %1322 = vmatprep.subr.mxu0 %v1120
        %1323 = vmatpush1.msra.mxu0 %v1119
        %1324 = vmatprep.subr.mxu0 %v1124
        %1325 = vmatpush1.msra.mxu0 %v1123
        %1326 = vmatprep.subr.mxu0 %v1128
        %1327 = vmatpush1.msra.mxu0 %v1127
        %1328 = vmatprep.subr.mxu0 %v1132
        %1329 = vmatpush1.msra.mxu0 %v1131
        %1330 = vmatprep.subr.mxu0 %v1136
        %1331 = vmatpush1.msra.mxu0 %v1135
        %1332 = vmatprep.subr.mxu0 %v1140
        %1333 = vmatpush1.msra.mxu0 %v1139
        %1334 = vmatprep.subr.mxu0 %v1144
        %1335 = vmatpush1.msra.mxu0 %v1143
        %1336 = vmatprep.subr.mxu0 %v1148
        %1337 = vmatpush1.msra.mxu0 %v1147
        %1338 = vmatprep.subr.mxu0 %v1152
        %1339 = vmatpush1.msra.mxu0 %v1151
        %1340 = vmatprep.subr.mxu0 %v1156
        %1341 = vmatpush1.msra.mxu0 %v1155
        %1342 = vmatprep.subr.mxu0 %v1160
        %1343 = vmatpush1.msra.mxu0 %v1159
        %1344 = vmatprep.subr.mxu0 %v1164
        %1345 = vmatpush1.msra.mxu0 %v1163
        %1346 = vmatprep.subr.mxu0 %v1168
        %1347 = vmatpush1.msra.mxu0 %v1167
        %1348 = vmatprep.subr.mxu0 %v1172
        %1349 = vmatpush1.msra.mxu0 %v1171
        %1350 = vmatprep.subr.mxu0 %v1176
        %1351 = vmatpush1.msra.mxu0 %v1175
        %1352 = vmatprep.subr.mxu0 %v1180
        %1353 = vmatpush1.msra.mxu0 %v1179
        %1354 = vmatprep.subr.mxu0 %v1184
        %1355 = vmatpush1.msra.mxu0 %v1183
        %1356 = vmatprep.subr.mxu0 %v1188
        %1357 = vmatpush1.msra.mxu0 %v1187
        %1358 = vmatprep.subr.mxu0 %v1192
        %1359 = vmatpush1.msra.mxu0 %v1191
        %1360 = vmatprep.subr.mxu0 %v1196
        %1361 = vmatpush1.msra.mxu0 %v1195
        %1362 = vmatprep.subr.mxu0 %v1200
        %1363 = vmatpush1.msra.mxu0 %v1199
        %1364 = vmatprep.subr.mxu0 %v1204
        %1365 = vmatpush1.msra.mxu0 %v1203
        %1366 = vmatprep.subr.mxu0 %v1208
        %1367 = vmatpush1.msra.mxu0 %v1207
        %1368 = vmatprep.subr.mxu0 %v1212
        %1369 = vmatpush1.msra.mxu0 %v1211
        %1370 = vmatprep.subr.mxu0 %v1216
        %1371 = vmatpush1.msra.mxu0 %v1215
        %1372 = vmatprep.subr.mxu0 %v1220
        %1373 = vmatpush1.msra.mxu0 %v1219
        %1374 = vmatprep.subr.mxu0 %v1224
        %1375 = vmatpush1.msra.mxu0 %v1223
        %1376 = vmatprep.subr.mxu0 %v1228
        %1377 = vmatpush1.msra.mxu0 %v1227
        %1378 = vmatprep.subr.mxu0 %v1232
        %1379 = vmatpush1.msra.mxu0 %v1231
        %1380 = vmatprep.subr.mxu0 %v1236
        %1381 = vmatpush1.msra.mxu0 %v1235
        %1382 = vmatprep.subr.mxu0 %v1240
        %1383 = vmatpush1.msra.mxu0 %v1239
        %1384 = vmatprep.mubr.f32.mxu0 %v974
        %1385 = vmatmul.mubr.f32.gmra.mrb[0].mxu0 %v973
        %v1386 = vpop.f32.mrb[0].mxu0
        %v1387 = vadd.f32 %v1310, %v1386
        %v1388 = vpop.f32.mrb[0].mxu0
        %v1389 = vadd.f32 %v1312, %v1388
        %1390 = vmatprep.mubr.f32.mxu0 %v978
        %1391 = vmatmul.mubr.f32.gmra.mrb[0].mxu0 %v977
        %v1392 = vpop.f32.mrb[0].mxu0
        %v1393 = vadd.f32 %v1316, %v1392
        %v1394 = vpop.f32.mrb[0].mxu0
        %v1395 = vadd.f32 %v1318, %v1394
        %1396 = vdwg.mxu0
        %1397 = vmatprep.subr.mxu0 %v990
        %1398 = vmatpush1.msra.mxu0 %v989
        %1399 = vmatprep.subr.mxu0 %v994
        %1400 = vmatpush1.msra.mxu0 %v993
        %1401 = vmatprep.subr.mxu0 %v998
        %1402 = vmatpush1.msra.mxu0 %v997
        %1403 = vmatprep.subr.mxu0 %v1002
        %1404 = vmatpush1.msra.mxu0 %v1001
        %1405 = vmatprep.subr.mxu0 %v1006
        %1406 = vmatpush1.msra.mxu0 %v1005
        %1407 = vmatprep.subr.mxu0 %v1010
        %1408 = vmatpush1.msra.mxu0 %v1009
        %1409 = vmatprep.subr.mxu0 %v1014
        %1410 = vmatpush1.msra.mxu0 %v1013
        %1411 = vmatprep.subr.mxu0 %v1018
        %1412 = vmatpush1.msra.mxu0 %v1017
        %1413 = vmatprep.subr.mxu0 %v1022
        %1414 = vmatpush1.msra.mxu0 %v1021
        %1415 = vmatprep.subr.mxu0 %v1026
        %1416 = vmatpush1.msra.mxu0 %v1025
        %1417 = vmatprep.subr.mxu0 %v1030
        %1418 = vmatpush1.msra.mxu0 %v1029
        %1419 = vmatprep.subr.mxu0 %v1034
        %1420 = vmatpush1.msra.mxu0 %v1033
        %1421 = vmatprep.subr.mxu0 %v1038
        %1422 = vmatpush1.msra.mxu0 %v1037
        %1423 = vmatprep.subr.mxu0 %v1042
        %1424 = vmatpush1.msra.mxu0 %v1041
        %1425 = vmatprep.subr.mxu0 %v1046
        %1426 = vmatpush1.msra.mxu0 %v1045
        %1427 = vmatprep.subr.mxu0 %v1050
        %1428 = vmatpush1.msra.mxu0 %v1049
        %1429 = vmatprep.subr.mxu0 %v1054
        %1430 = vmatpush1.msra.mxu0 %v1053
        %1431 = vmatprep.subr.mxu0 %v1058
        %1432 = vmatpush1.msra.mxu0 %v1057
        %1433 = vmatprep.subr.mxu0 %v1062
        %1434 = vmatpush1.msra.mxu0 %v1061
        %1435 = vmatprep.subr.mxu0 %v1066
        %1436 = vmatpush1.msra.mxu0 %v1065
        %1437 = vmatprep.subr.mxu0 %v1070
        %1438 = vmatpush1.msra.mxu0 %v1069
        %1439 = vmatprep.subr.mxu0 %v1074
        %1440 = vmatpush1.msra.mxu0 %v1073
        %1441 = vmatprep.subr.mxu0 %v1078
        %1442 = vmatpush1.msra.mxu0 %v1077
        %1443 = vmatprep.subr.mxu0 %v1082
        %1444 = vmatpush1.msra.mxu0 %v1081
        %1445 = vmatprep.subr.mxu0 %v1086
        %1446 = vmatpush1.msra.mxu0 %v1085
        %1447 = vmatprep.subr.mxu0 %v1090
        %1448 = vmatpush1.msra.mxu0 %v1089
        %1449 = vmatprep.subr.mxu0 %v1094
        %1450 = vmatpush1.msra.mxu0 %v1093
        %1451 = vmatprep.subr.mxu0 %v1098
        %1452 = vmatpush1.msra.mxu0 %v1097
        %1453 = vmatprep.subr.mxu0 %v1102
        %1454 = vmatpush1.msra.mxu0 %v1101
        %1455 = vmatprep.subr.mxu0 %v1106
        %1456 = vmatpush1.msra.mxu0 %v1105
        %1457 = vmatprep.subr.mxu0 %v1110
        %1458 = vmatpush1.msra.mxu0 %v1109
        %1459 = vmatprep.subr.mxu0 %v1114
        %1460 = vmatpush1.msra.mxu0 %v1113
        %1461 = vmatprep.mubr.f32.mxu0 %v972
        %1462 = vmatmul.mubr.f32.gmra.mrb[0].mxu0 %v971
        %v1463 = vpop.f32.mrb[0].mxu0
        %v1464 = vadd.f32 0.0, %v1463
        %v1465 = vpop.f32.mrb[0].mxu0
        %v1466 = vadd.f32 0.0, %v1465
        %1467 = vmatprep.mubr.f32.mxu0 %v976
        %1468 = vmatmul.mubr.f32.gmra.mrb[0].mxu0 %v975
        %v1469 = vpop.f32.mrb[0].mxu0
        %v1470 = vadd.f32 0.0, %v1469
        %v1471 = vpop.f32.mrb[0].mxu0
        %v1472 = vadd.f32 0.0, %v1471
        %1473 = vdwg.mxu0
        %1474 = vmatprep.subr.mxu0 %v1118
        %1475 = vmatpush1.msra.mxu0 %v1117
        %1476 = vmatprep.subr.mxu0 %v1122
        %1477 = vmatpush1.msra.mxu0 %v1121
        %1478 = vmatprep.subr.mxu0 %v1126
        %1479 = vmatpush1.msra.mxu0 %v1125
        %1480 = vmatprep.subr.mxu0 %v1130
        %1481 = vmatpush1.msra.mxu0 %v1129
        %1482 = vmatprep.subr.mxu0 %v1134
        %1483 = vmatpush1.msra.mxu0 %v1133
        %1484 = vmatprep.subr.mxu0 %v1138
        %1485 = vmatpush1.msra.mxu0 %v1137
        %1486 = vmatprep.subr.mxu0 %v1142
        %1487 = vmatpush1.msra.mxu0 %v1141
        %1488 = vmatprep.subr.mxu0 %v1146
        %1489 = vmatpush1.msra.mxu0 %v1145
        %1490 = vmatprep.subr.mxu0 %v1150
        %1491 = vmatpush1.msra.mxu0 %v1149
        %1492 = vmatprep.subr.mxu0 %v1154
        %1493 = vmatpush1.msra.mxu0 %v1153
        %1494 = vmatprep.subr.mxu0 %v1158
        %1495 = vmatpush1.msra.mxu0 %v1157
        %1496 = vmatprep.subr.mxu0 %v1162
        %1497 = vmatpush1.msra.mxu0 %v1161
        %1498 = vmatprep.subr.mxu0 %v1166
        %1499 = vmatpush1.msra.mxu0 %v1165
        %1500 = vmatprep.subr.mxu0 %v1170
        %1501 = vmatpush1.msra.mxu0 %v1169
        %1502 = vmatprep.subr.mxu0 %v1174
        %1503 = vmatpush1.msra.mxu0 %v1173
        %1504 = vmatprep.subr.mxu0 %v1178
        %1505 = vmatpush1.msra.mxu0 %v1177
        %1506 = vmatprep.subr.mxu0 %v1182
        %1507 = vmatpush1.msra.mxu0 %v1181
        %1508 = vmatprep.subr.mxu0 %v1186
        %1509 = vmatpush1.msra.mxu0 %v1185
        %1510 = vmatprep.subr.mxu0 %v1190
        %1511 = vmatpush1.msra.mxu0 %v1189
        %1512 = vmatprep.subr.mxu0 %v1194
        %1513 = vmatpush1.msra.mxu0 %v1193
        %1514 = vmatprep.subr.mxu0 %v1198
        %1515 = vmatpush1.msra.mxu0 %v1197
        %1516 = vmatprep.subr.mxu0 %v1202
        %1517 = vmatpush1.msra.mxu0 %v1201
        %1518 = vmatprep.subr.mxu0 %v1206
        %1519 = vmatpush1.msra.mxu0 %v1205
        %1520 = vmatprep.subr.mxu0 %v1210
        %1521 = vmatpush1.msra.mxu0 %v1209
        %1522 = vmatprep.subr.mxu0 %v1214
        %1523 = vmatpush1.msra.mxu0 %v1213
        %1524 = vmatprep.subr.mxu0 %v1218
        %1525 = vmatpush1.msra.mxu0 %v1217
        %1526 = vmatprep.subr.mxu0 %v1222
        %1527 = vmatpush1.msra.mxu0 %v1221
        %1528 = vmatprep.subr.mxu0 %v1226
        %1529 = vmatpush1.msra.mxu0 %v1225
        %1530 = vmatprep.subr.mxu0 %v1230
        %1531 = vmatpush1.msra.mxu0 %v1229
        %1532 = vmatprep.subr.mxu0 %v1234
        %1533 = vmatpush1.msra.mxu0 %v1233
        %1534 = vmatprep.subr.mxu0 %v1238
        %1535 = vmatpush1.msra.mxu0 %v1237
        %1536 = vmatprep.subr.mxu0 %v1242
        %1537 = vmatpush1.msra.mxu0 %v1241
        %1538 = vmatprep.mubr.f32.mxu0 %v974
        %1539 = vmatmul.mubr.f32.gmra.mrb[0].mxu0 %v973
        %v1540 = vpop.f32.mrb[0].mxu0
        %v1541 = vadd.f32 %v1464, %v1540
        %v1542 = vpop.f32.mrb[0].mxu0
        %v1543 = vadd.f32 %v1466, %v1542
        %1544 = vmatprep.mubr.f32.mxu0 %v978
        %1545 = vmatmul.mubr.f32.gmra.mrb[0].mxu0 %v977
        %v1546 = vpop.f32.mrb[0].mxu0
        %v1547 = vadd.f32 %v1470, %v1546
        %v1548 = vpop.f32.mrb[0].mxu0
        %v1549 = vadd.f32 %v1472, %v1548
        %1550 = vdwg.mxu0
        %v1551 = vadd.f32 %v979, %v1387
        %v1552 = vadd.f32 %v980, %v1389
        %v1553 = vadd.f32 %v981, %v1541
        %v1554 = vadd.f32 %v982, %v1543
        %v1555 = vadd.f32 %v983, %v1393
        %v1556 = vadd.f32 %v984, %v1395
        %v1557 = vadd.f32 %v985, %v1547
        %v1558 = vadd.f32 %v986, %v1549
        %1559 = vst [vmem:[#allocation2] sm:$0xff] %v1551
        %1560 = vst [vmem:[#allocation2 + $0x8] sm:$0xff] %v1552
        %1561 = vst [vmem:[#allocation2 + $0x10] sm:$0xff] %v1553
        %1562 = vst [vmem:[#allocation2 + $0x18] sm:$0xff] %v1554
        %1563 = vst [vmem:[#allocation2 + $0x20] sm:$0xff] %v1555
        %1564 = vst [vmem:[#allocation2 + $0x28] sm:$0xff] %v1556
        %1565 = vst [vmem:[#allocation2 + $0x30] sm:$0xff] %v1557
        %1566 = vst [vmem:[#allocation2 + $0x38] sm:$0xff] %v1558
        %p1567 = scmp.eq.s32.totalorder %s29, 3
        // Predicated region
        $region65: #{positionwise_feedforward.1} parent=39 // pred_check
          %p1568 = pneg %p1567
        $region66: #{positionwise_feedforward.1} parent=39 // pred_check_branch
          %1570 = sbr.rel (%p1568) target = $region68
        $region67: #{positionwise_feedforward.1} parent=39 // pred_region
          %v1571 = vld [vmem:[#allocation2] sm:$0xff]
          %v1572 = vld [vmem:[#allocation2 + $0x8] sm:$0xff]
          %v1573 = vld [vmem:[#allocation2 + $0x10] sm:$0xff]
          %v1574 = vld [vmem:[#allocation2 + $0x18] sm:$0xff]
          %v1575 = vld [vmem:[#allocation2 + $0x20] sm:$0xff]
          %v1576 = vld [vmem:[#allocation2 + $0x28] sm:$0xff]
          %v1577 = vld [vmem:[#allocation2 + $0x30] sm:$0xff]
          %v1578 = vld [vmem:[#allocation2 + $0x38] sm:$0xff]
          %v1579 = vld [vmem:[#allocation11] sm:$0xf]
          %v1581 = vlaneseq
          %v1582 = vshrl.u32 %v1581, 7
          %v1583 = vsub.s32 0, %v1582
          %v1584 = vrot.slane %v1579, %v1583
          %v1585 = vlaneseq
          %v1586 = vshrl.u32 %v1585, 7
          %v1587 = vsub.s32 1, %v1586
          %v1588 = vrot.slane %v1579, %v1587
          %v1589 = vlaneseq
          %v1590 = vshrl.u32 %v1589, 7
          %v1591 = vsub.s32 2, %v1590
          %v1592 = vrot.slane %v1579, %v1591
          %v1593 = vlaneseq
          %v1594 = vshrl.u32 %v1593, 7
          %v1595 = vsub.s32 3, %v1594
          %v1596 = vrot.slane %v1579, %v1595
          %v1601 = vadd.f32 %v1571, %v1584
          %v1602 = vadd.f32 %v1572, %v1588
          %v1603 = vadd.f32 %v1573, %v1592
          %v1604 = vadd.f32 %v1574, %v1596
          %v1605 = vadd.f32 %v1575, %v1584
          %v1606 = vadd.f32 %v1576, %v1588
          %v1607 = vadd.f32 %v1577, %v1592
          %v1608 = vadd.f32 %v1578, %v1596
          %1609 = vst [vmem:[#allocation12] sm:$0xff] %v1601
          %1610 = vst [vmem:[#allocation12 + $0x8] sm:$0xff] %v1602
          %1611 = vst [vmem:[#allocation12 + $0x10] sm:$0xff] %v1603
          %1612 = vst [vmem:[#allocation12 + $0x18] sm:$0xff] %v1604
          %1613 = vst [vmem:[#allocation12 + $0x20] sm:$0xff] %v1605
          %1614 = vst [vmem:[#allocation12 + $0x28] sm:$0xff] %v1606
          %1615 = vst [vmem:[#allocation12 + $0x30] sm:$0xff] %v1607
          %1616 = vst [vmem:[#allocation12 + $0x38] sm:$0xff] %v1608
        $region68: #{positionwise_feedforward.1} parent=39 // pred_fallthru
          _
        // Predicated region
        $region69: #{positionwise_feedforward.1} parent=39 // pred_check
          %p1617 = pneg %p179
        $region70: #{positionwise_feedforward.1} parent=39 // pred_check_branch
          %1619 = sbr.rel (%p1617) target = $region72
        $region71: #{positionwise_feedforward.1} parent=39 // pred_region
          %s1620 = smul.u32 2, %s28
          %s1622 = ssub.s32 1024, 1024
          %1623 = vsyncadd [#allocation5], %s1622
          %s1624 = smul.addr %s1620, 4
          %s1625 = smul.addr %s1624, 128
          %s1626 = scalar_lea.hbm %s5, %s1625
          %s1627 = sshll.u32 [#allocation12], 4
          %s1628 = int_to_ptr.vmem [resolvable:$true] %s1627
          %1633 = dma.vmem_to_hbm [thread:$0]  %s1628, 1024, %s1626, [#allocation5], 512, 512, 32
        $region72: #{positionwise_feedforward.1} parent=39 // pred_fallthru
          _
        // Predicated region
        $region73: #{positionwise_feedforward.1} parent=39 // pred_check
          %p1634 = pneg %p179
        $region74: #{positionwise_feedforward.1} parent=39 // pred_check_branch
          %1636 = sbr.rel (%p1634) target = $region76
        $region75: #{positionwise_feedforward.1} parent=39 // pred_region
          %1637 = dma.done [#allocation5], 1024
        $region76: #{positionwise_feedforward.1} parent=39 // pred_fallthru
          _
      $region40: #{positionwise_feedforward.1} parent=5 // pred_fallthru
        _
      %p1638 = scmp.le.s32.totalorder 2, %s19
      // Predicated region
      $region77: #{positionwise_feedforward.1} parent=5 // pred_check
        %p1639 = pneg %p1638
      $region78: #{positionwise_feedforward.1} parent=5 // pred_check_branch
        %1641 = sbr.rel (%p1639) target = $region80
      $region79: #{positionwise_feedforward.1} parent=5 // pred_region
        %s1642 = ssub.s32 %s19, 2
      $region80: #{positionwise_feedforward.1} parent=5 // pred_fallthru
        _
    $region6: #{positionwise_feedforward.1} parent=1 // loop_footer
      %s23 = sadd.s32 1, %s19
    $region7: #{positionwise_feedforward.1} parent=1 // loop_footer_branch
      %18 = sbr.rel target = $region3
    $region8: #{positionwise_feedforward.1} parent=1 // loop_exit
      _
    %1643 = vsyncpa [#allocation4], 1
    %s1644 = scalar_lea.sflag [#allocation4], 1
    %1645 = vsyncpa %s1644, 1
    %1646 = vsyncpa [#allocation7], 1
    %s1647 = scalar_lea.sflag [#allocation7], 1
    %1648 = vsyncpa %s1647, 1
    %1649 = vsyncpa [#allocation10], 1
    %s1650 = scalar_lea.sflag [#allocation10], 1
    %1651 = vsyncpa %s1650, 1
    %1652 = vsyncpa [#allocation5], 1
    %s1653 = scalar_lea.sflag [#allocation5], 1
    %1654 = vsyncpa %s1653, 1

</llo_original>
